<compile_context>
chip_gen: v7x
topology: tpu7x:2x2x1
jax: 0.10.0
libtpu: 0.0.40
codegen_flags: <defaults>
</compile_context>

<pallas_src>
import jax
import jax.numpy as jnp
from jax.experimental import pallas as pl
from jax.experimental.pallas import tpu as pltpu

LANE = 128


def _round_up(v, m):
    return (v + m - 1) // m * m


# ----------------------------- Pallas kernels -------------------------------

def _conv_pool_kernel(a_ref, b_ref, c_ref, d_ref, w_ref, bias_ref, o_ref):
    """Fused conv-as-GEMM + bias + ReLU + 2x2 max pool for one image.

    a/b/c/d: (1, PH*PW, Kp) bf16 im2col patches of the four pooling quadrants.
    w: (Kp, Cp) bf16, bias: (1, Cp) f32, o: (1, PH*PW, Cp) bf16.
    relu(conv + b) then pool == relu(max_i(conv_i) + b)  (bias shared, relu monotone).
    """
    w = w_ref[...]

    def mm(r):
        return jnp.dot(r[0], w, preferred_element_type=jnp.float32)

    z = jnp.maximum(jnp.maximum(mm(a_ref), mm(b_ref)),
                    jnp.maximum(mm(c_ref), mm(d_ref)))
    z = jnp.maximum(z + bias_ref[...], 0.0)
    o_ref[0] = z.astype(o_ref.dtype)


def _fc_head_kernel(x_ref, w1_ref, b1_ref, w2_ref, b2_ref, w3_ref, b3_ref, o_ref):
    """fc1+ReLU -> fc2+ReLU -> fc3 fused; intermediates stay in VMEM/vregs."""
    h = jnp.dot(x_ref[...], w1_ref[...], preferred_element_type=jnp.float32)
    h = jnp.maximum(h + b1_ref[...], 0.0)
    h = jnp.dot(h.astype(w2_ref.dtype), w2_ref[...], preferred_element_type=jnp.float32)
    h = jnp.maximum(h + b2_ref[...], 0.0)
    h = jnp.dot(h.astype(w3_ref.dtype), w3_ref[...], preferred_element_type=jnp.float32)
    o_ref[...] = (h + b3_ref[...]).astype(o_ref.dtype)


# ----------------------------- wrappers --------------------------------------

def _im2col_pool_quadrants(x, kh, kw, k_pad):
    """x: (N,H,W,C) NHWC -> 4 pool-quadrant patch matrices (N, PH*PW, k_pad).

    Quadrant (dh, dw) row (p, q) holds the patch of conv output pixel (2p+dh, 2q+dw),
    K ordered (kh, kw, c) and zero-padded to k_pad."""
    n, h, w, c = x.shape
    oh, ow = h - kh + 1, w - kw + 1
    ph, pw = oh // 2, ow // 2
    k = kh * kw * c
    quads = []
    for dh in (0, 1):
        for dw in (0, 1):
            cols = [x[:, dh + i: dh + i + oh: 2, dw + j: dw + j + ow: 2, :]
                    for i in range(kh) for j in range(kw)]
            q = jnp.concatenate(cols, axis=-1).reshape(n, ph * pw, k)
            if k_pad > k:
                q = jnp.pad(q, ((0, 0), (0, 0), (0, k_pad - k)))
            quads.append(q)
    return quads, (n, ph, pw)


def conv_relu_pool_pallas(x_nhwc, w_oihw, bias):
    """VALID conv (stride 1) + bias + ReLU + 2x2/2 max pool, fused in one kernel.

    Returns (N, PH, PW, 128) bf16; real channels live in [..., :OC], rest is zero pad."""
    oc, cin, kh, kw = w_oihw.shape
    k = kh * kw * cin
    k_pad = _round_up(k, LANE)
    c_pad = _round_up(oc, LANE)

    quads, (n, ph, pw) = _im2col_pool_quadrants(
        x_nhwc.astype(jnp.bfloat16), kh, kw, k_pad)

    # weight: OIHW -> (kh, kw, c, oc) -> (K, OC), zero-padded, bf16 MXU operand.
    w_mat = jnp.transpose(w_oihw, (2, 3, 1, 0)).reshape(k, oc)
    w_mat = jnp.pad(w_mat, ((0, k_pad - k), (0, c_pad - oc))).astype(jnp.bfloat16)
    b_mat = jnp.pad(bias, (0, c_pad - oc)).reshape(1, c_pad).astype(jnp.float32)

    m = ph * pw
    patch_spec = pl.BlockSpec((1, m, k_pad), lambda i: (i, 0, 0))
    out = pl.pallas_call(
        _conv_pool_kernel,
        out_shape=jax.ShapeDtypeStruct((n, m, c_pad), jnp.bfloat16),
        grid=(n,),
        in_specs=[patch_spec, patch_spec, patch_spec, patch_spec,
                  pl.BlockSpec((k_pad, c_pad), lambda i: (0, 0)),
                  pl.BlockSpec((1, c_pad), lambda i: (0, 0))],
        out_specs=pl.BlockSpec((1, m, c_pad), lambda i: (i, 0, 0)),
        compiler_params=pltpu.CompilerParams(dimension_semantics=("parallel",)),
    )(*quads, w_mat, b_mat)
    return out.reshape(n, ph, pw, c_pad)


def fc_head_pallas(feats, w1, b1, w2, b2, w3, b3):
    """Fused fc1(ReLU) -> fc2(ReLU) -> fc3.  feats: (N, 400) in (h, w, c) flatten order."""
    n, k = feats.shape
    n_out = w3.shape[1]
    m_pad = _round_up(max(n, 8), 8)     # sublane-friendly M
    f_pad = LANE                        # lane-dense hidden/output width

    x = jnp.pad(feats.astype(jnp.bfloat16), ((0, m_pad - n), (0, 0)))
    w1p = jnp.pad(w1, ((0, 0), (0, f_pad - w1.shape[1]))).astype(jnp.bfloat16)
    w2p = jnp.pad(w2, ((0, f_pad - w2.shape[0]), (0, f_pad - w2.shape[1]))).astype(jnp.bfloat16)
    w3p = jnp.pad(w3, ((0, f_pad - w3.shape[0]), (0, f_pad - w3.shape[1]))).astype(jnp.bfloat16)
    b1p = jnp.pad(b1, (0, f_pad - b1.shape[0])).reshape(1, f_pad).astype(jnp.float32)
    b2p = jnp.pad(b2, (0, f_pad - b2.shape[0])).reshape(1, f_pad).astype(jnp.float32)
    b3p = jnp.pad(b3, (0, f_pad - b3.shape[0])).reshape(1, f_pad).astype(jnp.float32)

    def spec(s):
        return pl.BlockSpec(s, lambda: (0, 0))

    out = pl.pallas_call(
        _fc_head_kernel,
        out_shape=jax.ShapeDtypeStruct((m_pad, f_pad), jnp.float32),
        in_specs=[spec((m_pad, k)),
                  spec((k, f_pad)), spec((1, f_pad)),
                  spec((f_pad, f_pad)), spec((1, f_pad)),
                  spec((f_pad, f_pad)), spec((1, f_pad))],
        out_specs=spec((m_pad, f_pad)),
    )(x, w1p, b1p, w2p, b2p, w3p, b3p)
    return out[:n, :n_out]


# ----------------------------- model ----------------------------------------

def init_params(key):
    ks = jax.random.split(key, 10)

    def w(k_, shape, fan_in):
        return jax.random.normal(k_, shape, jnp.float32) / jnp.sqrt(fan_in)

    return {
        "conv1_w": w(ks[0], (6, 3, 5, 5), 3 * 25),
        "conv1_b": w(ks[1], (6,), 3 * 25),
        "conv2_w": w(ks[2], (16, 6, 5, 5), 6 * 25),
        "conv2_b": w(ks[3], (16,), 6 * 25),
        "fc1_w": w(ks[4], (16 * 5 * 5, 120), 400),
        "fc1_b": w(ks[5], (120,), 400),
        "fc2_w": w(ks[6], (120, 84), 120),
        "fc2_b": w(ks[7], (84,), 120),
        "fc3_w": w(ks[8], (84, 10), 84),
        "fc3_b": w(ks[9], (10,), 84),
    }


def forward(params, x_nchw):
    x = jnp.transpose(x_nchw, (0, 2, 3, 1))                                   # NHWC once
    oc1 = params["conv1_w"].shape[0]
    oc2 = params["conv2_w"].shape[0]
    y = conv_relu_pool_pallas(x, params["conv1_w"], params["conv1_b"])        # (N,14,14,128)
    y = conv_relu_pool_pallas(y[..., :oc1], params["conv2_w"], params["conv2_b"])  # (N,5,5,128)
    feats = y[..., :oc2].reshape(y.shape[0], oc2 * 5 * 5)                     # (N,400), hwc order
    return fc_head_pallas(feats, params["fc1_w"], params["fc1_b"],
                          params["fc2_w"], params["fc2_b"],
                          params["fc3_w"], params["fc3_b"])


def forward_ref(params, x_nchw):
    # Pure-JAX f32 reference (same NHWC flatten convention for fc1).
    x = jnp.transpose(x_nchw, (0, 2, 3, 1))

    def conv(x, w_oihw, b):
        w_hwio = jnp.transpose(w_oihw, (2, 3, 1, 0))
        y = jax.lax.conv_general_dilated(
            x, w_hwio, window_strides=(1, 1), padding="VALID",
            dimension_numbers=("NHWC", "HWIO", "NHWC"))
        return jnp.maximum(y + b, 0.0)

    def pool(x):
        n, h, w, c = x.shape
        return x.reshape(n, h // 2, 2, w // 2, 2, c).max(axis=(2, 4))

    x = pool(conv(x, params["conv1_w"], params["conv1_b"]))
    x = pool(conv(x, params["conv2_w"], params["conv2_b"]))
    x = x.reshape(x.shape[0], -1)
    x = jnp.maximum(x @ params["fc1_w"] + params["fc1_b"], 0.0)
    x = jnp.maximum(x @ params["fc2_w"] + params["fc2_b"], 0.0)
    return x @ params["fc3_w"] + params["fc3_b"]


if __name__ == "__main__":
    root = jax.random.PRNGKey(0)
    params = init_params(root)
    x = jax.random.normal(jax.random.PRNGKey(0), (2, 3, 32, 32), jnp.float32)

    out = jax.block_until_ready(jax.jit(forward)(params, x))
    assert out.shape == (2, 10), out.shape

    ref = jax.block_until_ready(forward_ref(params, x))
    # bf16 MXU operands (f32 accumulation) vs f32 reference -> a few 1e-2 on O(1) logits.
    assert jnp.allclose(out, ref, rtol=1e-1, atol=1e-1), (
        f"max abs diff {float(jnp.max(jnp.abs(out - ref)))}")

    print("KERNEL_OK")
</pallas_src>

<mosaic_0001>
module attributes {stable_mosaic.version = 11 : i64} {
  func.func @_conv_pool_kernel(%arg0: i32, %arg1: memref<1x196x128xbf16, #tpu.memory_space<vmem>>, %arg2: memref<1x196x128xbf16, #tpu.memory_space<vmem>>, %arg3: memref<1x196x128xbf16, #tpu.memory_space<vmem>>, %arg4: memref<1x196x128xbf16, #tpu.memory_space<vmem>>, %arg5: memref<128x128xbf16, #tpu.memory_space<vmem>>, %arg6: memref<1x128xf32, #tpu.memory_space<vmem>>, %arg7: memref<1x196x128xbf16, #tpu.memory_space<vmem>>) attributes {dimension_semantics = [#tpu.dimension_semantics<parallel>], iteration_bounds = array<i64: 2>, scalar_prefetch = 0 : i64, scratch_operands = 0 : i64, tpu.core_type = #tpu.core_type<tc>, window_params = [{transform_indices = @transform_0, window_bounds = array<i64: 1, 196, 128>}, {transform_indices = @transform_1, window_bounds = array<i64: 1, 196, 128>}, {transform_indices = @transform_2, window_bounds = array<i64: 1, 196, 128>}, {transform_indices = @transform_3, window_bounds = array<i64: 1, 196, 128>}, {pipeline_mode = #tpu.pipeline_mode<synchronous>, transform_indices = @transform_4, window_bounds = array<i64: 128, 128>}, {pipeline_mode = #tpu.pipeline_mode<synchronous>, transform_indices = @transform_5, window_bounds = array<i64: 1, 128>}, {transform_indices = @transform_6, window_bounds = array<i64: 1, 196, 128>}]} {
    %c0 = arith.constant 0 : index
    %c0_0 = arith.constant 0 : index
    %0 = vector.load %arg5[%c0, %c0_0] : memref<128x128xbf16, #tpu.memory_space<vmem>>, vector<128x128xbf16>
    %c0_1 = arith.constant 0 : index
    %c0_2 = arith.constant 0 : index
    %c0_3 = arith.constant 0 : index
    %1 = vector.load %arg1[%c0_1, %c0_2, %c0_3] : memref<1x196x128xbf16, #tpu.memory_space<vmem>>, vector<1x196x128xbf16>
    %2 = vector.shape_cast %1 : vector<1x196x128xbf16> to vector<196x128xbf16>
    %cst = arith.constant dense<0.000000e+00> : vector<196x128xf32>
    %3 = tpu.matmul %2, %0, %cst {dimension_numbers = #tpu.dot_dimension_numbers<[1], [0], [0], [1], [0, 0, 1, 1], [], []>} : vector<196x128xbf16>, vector<128x128xbf16>, vector<196x128xf32> -> vector<196x128xf32>
    %c0_4 = arith.constant 0 : index
    %c0_5 = arith.constant 0 : index
    %c0_6 = arith.constant 0 : index
    %4 = vector.load %arg2[%c0_4, %c0_5, %c0_6] : memref<1x196x128xbf16, #tpu.memory_space<vmem>>, vector<1x196x128xbf16>
    %5 = vector.shape_cast %4 : vector<1x196x128xbf16> to vector<196x128xbf16>
    %cst_7 = arith.constant dense<0.000000e+00> : vector<196x128xf32>
    %6 = tpu.matmul %5, %0, %cst_7 {dimension_numbers = #tpu.dot_dimension_numbers<[1], [0], [0], [1], [0, 0, 1, 1], [], []>} : vector<196x128xbf16>, vector<128x128xbf16>, vector<196x128xf32> -> vector<196x128xf32>
    %7 = arith.maximumf %3, %6 : vector<196x128xf32>
    %c0_8 = arith.constant 0 : index
    %c0_9 = arith.constant 0 : index
    %c0_10 = arith.constant 0 : index
    %8 = vector.load %arg3[%c0_8, %c0_9, %c0_10] : memref<1x196x128xbf16, #tpu.memory_space<vmem>>, vector<1x196x128xbf16>
    %9 = vector.shape_cast %8 : vector<1x196x128xbf16> to vector<196x128xbf16>
    %cst_11 = arith.constant dense<0.000000e+00> : vector<196x128xf32>
    %10 = tpu.matmul %9, %0, %cst_11 {dimension_numbers = #tpu.dot_dimension_numbers<[1], [0], [0], [1], [0, 0, 1, 1], [], []>} : vector<196x128xbf16>, vector<128x128xbf16>, vector<196x128xf32> -> vector<196x128xf32>
    %c0_12 = arith.constant 0 : index
    %c0_13 = arith.constant 0 : index
    %c0_14 = arith.constant 0 : index
    %11 = vector.load %arg4[%c0_12, %c0_13, %c0_14] : memref<1x196x128xbf16, #tpu.memory_space<vmem>>, vector<1x196x128xbf16>
    %12 = vector.shape_cast %11 : vector<1x196x128xbf16> to vector<196x128xbf16>
    %cst_15 = arith.constant dense<0.000000e+00> : vector<196x128xf32>
    %13 = tpu.matmul %12, %0, %cst_15 {dimension_numbers = #tpu.dot_dimension_numbers<[1], [0], [0], [1], [0, 0, 1, 1], [], []>} : vector<196x128xbf16>, vector<128x128xbf16>, vector<196x128xf32> -> vector<196x128xf32>
    %14 = arith.maximumf %10, %13 : vector<196x128xf32>
    %15 = arith.maximumf %7, %14 : vector<196x128xf32>
    %c0_16 = arith.constant 0 : index
    %c0_17 = arith.constant 0 : index
    %16 = vector.load %arg6[%c0_16, %c0_17] : memref<1x128xf32, #tpu.memory_space<vmem>>, vector<1x128xf32>
    %17 = vector.broadcast %16 : vector<1x128xf32> to vector<196x128xf32>
    %18 = arith.addf %15, %17 : vector<196x128xf32>
    %cst_18 = arith.constant 0.000000e+00 : f32
    %19 = vector.broadcast %cst_18 : f32 to vector<196x128xf32>
    %20 = arith.maximumf %18, %19 : vector<196x128xf32>
    %21 = arith.truncf %20 : vector<196x128xf32> to vector<196x128xbf16>
    %c0_19 = arith.constant 0 : index
    %c0_20 = arith.constant 0 : index
    %c0_21 = arith.constant 0 : index
    %22 = vector.load %arg7[%c0_19, %c0_20, %c0_21] : memref<1x196x128xbf16, #tpu.memory_space<vmem>>, vector<1x196x128xbf16>
    %23 = vector.shape_cast %22 : vector<1x196x128xbf16> to vector<196x128xbf16>
    %24 = vector.shape_cast %21 : vector<196x128xbf16> to vector<1x196x128xbf16>
    tpu.vector_store %arg7[%c0_19, %c0_20, %c0_21], %24 {strides = array<i32>} : memref<1x196x128xbf16, #tpu.memory_space<vmem>>, vector<1x196x128xbf16>,
    return
  }
  func.func @transform_0(%arg0: i32) -> (i32, i32, i32) {
    %c0_i32 = arith.constant 0 : i32
    %c0_i32_0 = arith.constant 0 : i32
    %c0_i32_1 = arith.constant 0 : i32
    return %arg0, %c0_i32, %c0_i32_0 : i32, i32, i32
  }
  func.func @transform_1(%arg0: i32) -> (i32, i32, i32) {
    %c0_i32 = arith.constant 0 : i32
    %c0_i32_0 = arith.constant 0 : i32
    %c0_i32_1 = arith.constant 0 : i32
    return %arg0, %c0_i32, %c0_i32_0 : i32, i32, i32
  }
  func.func @transform_2(%arg0: i32) -> (i32, i32, i32) {
    %c0_i32 = arith.constant 0 : i32
    %c0_i32_0 = arith.constant 0 : i32
    %c0_i32_1 = arith.constant 0 : i32
    return %arg0, %c0_i32, %c0_i32_0 : i32, i32, i32
  }
  func.func @transform_3(%arg0: i32) -> (i32, i32, i32) {
    %c0_i32 = arith.constant 0 : i32
    %c0_i32_0 = arith.constant 0 : i32
    %c0_i32_1 = arith.constant 0 : i32
    return %arg0, %c0_i32, %c0_i32_0 : i32, i32, i32
  }
  func.func @transform_4(%arg0: i32) -> (i32, i32) {
    %c0_i32 = arith.constant 0 : i32
    %c0_i32_0 = arith.constant 0 : i32
    %c0_i32_1 = arith.constant 0 : i32
    return %c0_i32, %c0_i32_0 : i32, i32
  }
  func.func @transform_5(%arg0: i32) -> (i32, i32) {
    %c0_i32 = arith.constant 0 : i32
    %c0_i32_0 = arith.constant 0 : i32
    %c0_i32_1 = arith.constant 0 : i32
    return %c0_i32, %c0_i32_0 : i32, i32
  }
  func.func @transform_6(%arg0: i32) -> (i32, i32, i32) {
    %c0_i32 = arith.constant 0 : i32
    %c0_i32_0 = arith.constant 0 : i32
    %c0_i32_1 = arith.constant 0 : i32
    return %arg0, %c0_i32, %c0_i32_0 : i32, i32, i32
  }
}

module attributes {stable_mosaic.version = 11 : i64} {
  func.func @_conv_pool_kernel(%arg0: i32, %arg1: memref<1x25x256xbf16, #tpu.memory_space<vmem>>, %arg2: memref<1x25x256xbf16, #tpu.memory_space<vmem>>, %arg3: memref<1x25x256xbf16, #tpu.memory_space<vmem>>, %arg4: memref<1x25x256xbf16, #tpu.memory_space<vmem>>, %arg5: memref<256x128xbf16, #tpu.memory_space<vmem>>, %arg6: memref<1x128xf32, #tpu.memory_space<vmem>>, %arg7: memref<1x25x128xbf16, #tpu.memory_space<vmem>>) attributes {dimension_semantics = [#tpu.dimension_semantics<parallel>], iteration_bounds = array<i64: 2>, scalar_prefetch = 0 : i64, scratch_operands = 0 : i64, tpu.core_type = #tpu.core_type<tc>, window_params = [{transform_indices = @transform_0, window_bounds = array<i64: 1, 25, 256>}, {transform_indices = @transform_1, window_bounds = array<i64: 1, 25, 256>}, {transform_indices = @transform_2, window_bounds = array<i64: 1, 25, 256>}, {transform_indices = @transform_3, window_bounds = array<i64: 1, 25, 256>}, {pipeline_mode = #tpu.pipeline_mode<synchronous>, transform_indices = @transform_4, window_bounds = array<i64: 256, 128>}, {pipeline_mode = #tpu.pipeline_mode<synchronous>, transform_indices = @transform_5, window_bounds = array<i64: 1, 128>}, {transform_indices = @transform_6, window_bounds = array<i64: 1, 25, 128>}]} {
    %c0 = arith.constant 0 : index
    %c0_0 = arith.constant 0 : index
    %0 = vector.load %arg5[%c0, %c0_0] : memref<256x128xbf16, #tpu.memory_space<vmem>>, vector<256x128xbf16>
    %c0_1 = arith.constant 0 : index
    %c0_2 = arith.constant 0 : index
    %c0_3 = arith.constant 0 : index
    %1 = vector.load %arg1[%c0_1, %c0_2, %c0_3] : memref<1x25x256xbf16, #tpu.memory_space<vmem>>, vector<1x25x256xbf16>
    %2 = vector.shape_cast %1 : vector<1x25x256xbf16> to vector<25x256xbf16>
    %cst = arith.constant dense<0.000000e+00> : vector<25x128xf32>
    %3 = tpu.matmul %2, %0, %cst {dimension_numbers = #tpu.dot_dimension_numbers<[1], [0], [0], [1], [0, 0, 1, 1], [], []>} : vector<25x256xbf16>, vector<256x128xbf16>, vector<25x128xf32> -> vector<25x128xf32>
    %c0_4 = arith.constant 0 : index
    %c0_5 = arith.constant 0 : index
    %c0_6 = arith.constant 0 : index
    %4 = vector.load %arg2[%c0_4, %c0_5, %c0_6] : memref<1x25x256xbf16, #tpu.memory_space<vmem>>, vector<1x25x256xbf16>
    %5 = vector.shape_cast %4 : vector<1x25x256xbf16> to vector<25x256xbf16>
    %cst_7 = arith.constant dense<0.000000e+00> : vector<25x128xf32>
    %6 = tpu.matmul %5, %0, %cst_7 {dimension_numbers = #tpu.dot_dimension_numbers<[1], [0], [0], [1], [0, 0, 1, 1], [], []>} : vector<25x256xbf16>, vector<256x128xbf16>, vector<25x128xf32> -> vector<25x128xf32>
    %7 = arith.maximumf %3, %6 : vector<25x128xf32>
    %c0_8 = arith.constant 0 : index
    %c0_9 = arith.constant 0 : index
    %c0_10 = arith.constant 0 : index
    %8 = vector.load %arg3[%c0_8, %c0_9, %c0_10] : memref<1x25x256xbf16, #tpu.memory_space<vmem>>, vector<1x25x256xbf16>
    %9 = vector.shape_cast %8 : vector<1x25x256xbf16> to vector<25x256xbf16>
    %cst_11 = arith.constant dense<0.000000e+00> : vector<25x128xf32>
    %10 = tpu.matmul %9, %0, %cst_11 {dimension_numbers = #tpu.dot_dimension_numbers<[1], [0], [0], [1], [0, 0, 1, 1], [], []>} : vector<25x256xbf16>, vector<256x128xbf16>, vector<25x128xf32> -> vector<25x128xf32>
    %c0_12 = arith.constant 0 : index
    %c0_13 = arith.constant 0 : index
    %c0_14 = arith.constant 0 : index
    %11 = vector.load %arg4[%c0_12, %c0_13, %c0_14] : memref<1x25x256xbf16, #tpu.memory_space<vmem>>, vector<1x25x256xbf16>
    %12 = vector.shape_cast %11 : vector<1x25x256xbf16> to vector<25x256xbf16>
    %cst_15 = arith.constant dense<0.000000e+00> : vector<25x128xf32>
    %13 = tpu.matmul %12, %0, %cst_15 {dimension_numbers = #tpu.dot_dimension_numbers<[1], [0], [0], [1], [0, 0, 1, 1], [], []>} : vector<25x256xbf16>, vector<256x128xbf16>, vector<25x128xf32> -> vector<25x128xf32>
    %14 = arith.maximumf %10, %13 : vector<25x128xf32>
    %15 = arith.maximumf %7, %14 : vector<25x128xf32>
    %c0_16 = arith.constant 0 : index
    %c0_17 = arith.constant 0 : index
    %16 = vector.load %arg6[%c0_16, %c0_17] : memref<1x128xf32, #tpu.memory_space<vmem>>, vector<1x128xf32>
    %17 = vector.broadcast %16 : vector<1x128xf32> to vector<25x128xf32>
    %18 = arith.addf %15, %17 : vector<25x128xf32>
    %cst_18 = arith.constant 0.000000e+00 : f32
    %19 = vector.broadcast %cst_18 : f32 to vector<25x128xf32>
    %20 = arith.maximumf %18, %19 : vector<25x128xf32>
    %21 = arith.truncf %20 : vector<25x128xf32> to vector<25x128xbf16>
    %c0_19 = arith.constant 0 : index
    %c0_20 = arith.constant 0 : index
    %c0_21 = arith.constant 0 : index
    %22 = vector.load %arg7[%c0_19, %c0_20, %c0_21] : memref<1x25x128xbf16, #tpu.memory_space<vmem>>, vector<1x25x128xbf16>
    %23 = vector.shape_cast %22 : vector<1x25x128xbf16> to vector<25x128xbf16>
    %24 = vector.shape_cast %21 : vector<25x128xbf16> to vector<1x25x128xbf16>
    tpu.vector_store %arg7[%c0_19, %c0_20, %c0_21], %24 {strides = array<i32>} : memref<1x25x128xbf16, #tpu.memory_space<vmem>>, vector<1x25x128xbf16>,
    return
  }
  func.func @transform_0(%arg0: i32) -> (i32, i32, i32) {
    %c0_i32 = arith.constant 0 : i32
    %c0_i32_0 = arith.constant 0 : i32
    %c0_i32_1 = arith.constant 0 : i32
    return %arg0, %c0_i32, %c0_i32_0 : i32, i32, i32
  }
  func.func @transform_1(%arg0: i32) -> (i32, i32, i32) {
    %c0_i32 = arith.constant 0 : i32
    %c0_i32_0 = arith.constant 0 : i32
    %c0_i32_1 = arith.constant 0 : i32
    return %arg0, %c0_i32, %c0_i32_0 : i32, i32, i32
  }
  func.func @transform_2(%arg0: i32) -> (i32, i32, i32) {
    %c0_i32 = arith.constant 0 : i32
    %c0_i32_0 = arith.constant 0 : i32
    %c0_i32_1 = arith.constant 0 : i32
    return %arg0, %c0_i32, %c0_i32_0 : i32, i32, i32
  }
  func.func @transform_3(%arg0: i32) -> (i32, i32, i32) {
    %c0_i32 = arith.constant 0 : i32
    %c0_i32_0 = arith.constant 0 : i32
    %c0_i32_1 = arith.constant 0 : i32
    return %arg0, %c0_i32, %c0_i32_0 : i32, i32, i32
  }
  func.func @transform_4(%arg0: i32) -> (i32, i32) {
    %c0_i32 = arith.constant 0 : i32
    %c0_i32_0 = arith.constant 0 : i32
    %c0_i32_1 = arith.constant 0 : i32
    return %c0_i32, %c0_i32_0 : i32, i32
  }
  func.func @transform_5(%arg0: i32) -> (i32, i32) {
    %c0_i32 = arith.constant 0 : i32
    %c0_i32_0 = arith.constant 0 : i32
    %c0_i32_1 = arith.constant 0 : i32
    return %c0_i32, %c0_i32_0 : i32, i32
  }
  func.func @transform_6(%arg0: i32) -> (i32, i32, i32) {
    %c0_i32 = arith.constant 0 : i32
    %c0_i32_0 = arith.constant 0 : i32
    %c0_i32_1 = arith.constant 0 : i32
    return %arg0, %c0_i32, %c0_i32_0 : i32, i32, i32
  }
}

module attributes {stable_mosaic.version = 11 : i64} {
  func.func @_fc_head_kernel(%arg0: memref<8x400xbf16, #tpu.memory_space<vmem>>, %arg1: memref<400x128xbf16, #tpu.memory_space<vmem>>, %arg2: memref<1x128xf32, #tpu.memory_space<vmem>>, %arg3: memref<128x128xbf16, #tpu.memory_space<vmem>>, %arg4: memref<1x128xf32, #tpu.memory_space<vmem>>, %arg5: memref<128x128xbf16, #tpu.memory_space<vmem>>, %arg6: memref<1x128xf32, #tpu.memory_space<vmem>>, %arg7: memref<8x128xf32, #tpu.memory_space<vmem>>) attributes {dimension_semantics = [], scalar_prefetch = 0 : i64, scratch_operands = 0 : i64, tpu.core_type = #tpu.core_type<tc>} {
    %c0 = arith.constant 0 : index
    %c0_0 = arith.constant 0 : index
    %0 = vector.load %arg0[%c0, %c0_0] : memref<8x400xbf16, #tpu.memory_space<vmem>>, vector<8x400xbf16>
    %c0_1 = arith.constant 0 : index
    %c0_2 = arith.constant 0 : index
    %1 = vector.load %arg1[%c0_1, %c0_2] : memref<400x128xbf16, #tpu.memory_space<vmem>>, vector<400x128xbf16>
    %cst = arith.constant dense<0.000000e+00> : vector<8x128xf32>
    %2 = tpu.matmul %0, %1, %cst {dimension_numbers = #tpu.dot_dimension_numbers<[1], [0], [0], [1], [0, 0, 1, 1], [], []>} : vector<8x400xbf16>, vector<400x128xbf16>, vector<8x128xf32> -> vector<8x128xf32>
    %c0_3 = arith.constant 0 : index
    %c0_4 = arith.constant 0 : index
    %3 = vector.load %arg2[%c0_3, %c0_4] : memref<1x128xf32, #tpu.memory_space<vmem>>, vector<1x128xf32>
    %4 = vector.broadcast %3 : vector<1x128xf32> to vector<8x128xf32>
    %5 = arith.addf %2, %4 : vector<8x128xf32>
    %cst_5 = arith.constant 0.000000e+00 : f32
    %6 = vector.broadcast %cst_5 : f32 to vector<8x128xf32>
    %7 = arith.maximumf %5, %6 : vector<8x128xf32>
    %8 = arith.truncf %7 : vector<8x128xf32> to vector<8x128xbf16>
    %c0_6 = arith.constant 0 : index
    %c0_7 = arith.constant 0 : index
    %9 = vector.load %arg3[%c0_6, %c0_7] : memref<128x128xbf16, #tpu.memory_space<vmem>>, vector<128x128xbf16>
    %cst_8 = arith.constant dense<0.000000e+00> : vector<8x128xf32>
    %10 = tpu.matmul %8, %9, %cst_8 {dimension_numbers = #tpu.dot_dimension_numbers<[1], [0], [0], [1], [0, 0, 1, 1], [], []>} : vector<8x128xbf16>, vector<128x128xbf16>, vector<8x128xf32> -> vector<8x128xf32>
    %c0_9 = arith.constant 0 : index
    %c0_10 = arith.constant 0 : index
    %11 = vector.load %arg4[%c0_9, %c0_10] : memref<1x128xf32, #tpu.memory_space<vmem>>, vector<1x128xf32>
    %12 = vector.broadcast %11 : vector<1x128xf32> to vector<8x128xf32>
    %13 = arith.addf %10, %12 : vector<8x128xf32>
    %cst_11 = arith.constant 0.000000e+00 : f32
    %14 = vector.broadcast %cst_11 : f32 to vector<8x128xf32>
    %15 = arith.maximumf %13, %14 : vector<8x128xf32>
    %16 = arith.truncf %15 : vector<8x128xf32> to vector<8x128xbf16>
    %c0_12 = arith.constant 0 : index
    %c0_13 = arith.constant 0 : index
    %17 = vector.load %arg5[%c0_12, %c0_13] : memref<128x128xbf16, #tpu.memory_space<vmem>>, vector<128x128xbf16>
    %cst_14 = arith.constant dense<0.000000e+00> : vector<8x128xf32>
    %18 = tpu.matmul %16, %17, %cst_14 {dimension_numbers = #tpu.dot_dimension_numbers<[1], [0], [0], [1], [0, 0, 1, 1], [], []>} : vector<8x128xbf16>, vector<128x128xbf16>, vector<8x128xf32> -> vector<8x128xf32>
    %c0_15 = arith.constant 0 : index
    %c0_16 = arith.constant 0 : index
    %19 = vector.load %arg6[%c0_15, %c0_16] : memref<1x128xf32, #tpu.memory_space<vmem>>, vector<1x128xf32>
    %20 = vector.broadcast %19 : vector<1x128xf32> to vector<8x128xf32>
    %21 = arith.addf %18, %20 : vector<8x128xf32>
    %c0_17 = arith.constant 0 : index
    %c0_18 = arith.constant 0 : index
    %22 = vector.load %arg7[%c0_17, %c0_18] : memref<8x128xf32, #tpu.memory_space<vmem>>, vector<8x128xf32>
    tpu.vector_store %arg7[%c0_17, %c0_18], %21 {strides = array<i32>} : memref<8x128xf32, #tpu.memory_space<vmem>>, vector<8x128xf32>,
    return
  }
}

</mosaic_0001>

<llo_original>
// kernel: forward.3
$region0: #{forward.3}
  #allocation0 [shape = 'u32[]', space=smem, size = 0x4, offset = 0x4, fixed_abs, tag = 'smem constant byte address 0x4 - core index']
  #allocation1 [shape = 'u32[144,128]{1,0:T(1,128)}', space=vmem, size = 0x12000, scoped, tag = 'internal scratch']
  %s0 = inlined_call_operand.vmem [shape: bf16[2,196,128], index: 0, kind: input, shape index: {}]
  %s1 = inlined_call_operand.vmem [shape: bf16[2,196,128], index: 1, kind: input, shape index: {}]
  %s2 = inlined_call_operand.vmem [shape: bf16[2,196,128], index: 2, kind: input, shape index: {}]
  %s3 = inlined_call_operand.vmem [shape: bf16[2,196,128], index: 3, kind: input, shape index: {}]
  %s4 = inlined_call_operand.vmem [shape: bf16[128,128], index: 4, kind: input, shape index: {}]
  %s5 = inlined_call_operand.vmem [shape: f32[1,128], index: 5, kind: input, shape index: {}]
  %s6 = inlined_call_operand.vmem [shape: bf16[2,196,128], index: 6, kind: output, shape index: {}]
  %s7 = sld [smem:[#allocation0]]
  $region57: #{forward.3} parent=0
    _
  %s9 = ssub.s32 1, %s7
  %s10 = scalar_select 0, %s9, %s7
  loop: start=0, step=1, limit=4
  $region2: #{forward.3} parent=0 // loop_pre_header
    _
  $region3: #{forward.3} parent=0 // loop_header
    %s12 = sphi 0, %s16
    %p13 = scmp.ge.s32.totalorder %s12, 4
    %s22 = sphi 0, %s24
    %s25 = sphi 0, %s22
    %s26 = sphi 0, %s25
    %s42 = sphi 0, %s26
    %s48 = sphi 0, %s50
    %s51 = sphi 0, %s48
    %s52 = sphi 0, %s51
    %s68 = sphi 0, %s52
    %s74 = sphi 0, %s76
    %s77 = sphi 0, %s74
    %s78 = sphi 0, %s77
    %s94 = sphi 0, %s78
    %s100 = sphi 0, %s102
    %s103 = sphi 0, %s100
    %s104 = sphi 0, %s103
    %s120 = sphi 0, %s104
    %s124 = sphi 0, %s124
    %s126 = sphi 0, %s124
    %s127 = sphi 0, %s126
    %s141 = sphi 0, %s127
    %s145 = sphi 0, %s145
    %s147 = sphi 0, %s145
    %s148 = sphi 0, %s147
    %s162 = sphi 0, %s148
    %s168 = sphi 0, %s170
    %s171 = sphi 0, %s168
    %s172 = sphi 0, %s171
    %s188 = sphi 0, %s172
  $region4: #{forward.3} parent=0 // loop_header_branch
    %15 = sbr.rel (%p13) target = $region8
  $region5: #{forward.3} parent=0 // loop_body
    %s17 = ssub.s32 %s12, 1
    %s18 = ssub.s32 %s12, 2
    %s19 = sadd.s32 %s12, 1
    %s20 = ssub.s32 %s12, %s19
    %p21 = scmp.eq.s32.totalorder %s20, 0
    %s23 = sadd.s32 %s22, 1
    %s24 = scalar_select %p21, %s22, %s23
    %p27 = pneg %p21
    %p28 = scmp.eq.s32.totalorder %s12, 1
    %p29 = por %p27, %p28
    %p30 = scmp.ne.s32.totalorder %s22, %s25
    %p31 = scmp.eq.s32.totalorder %s12, 0
    %p32 = por %p30, %p31
    %p33 = scmp.ne.s32.totalorder %s22, %s25
    %p34 = scmp.eq.s32.totalorder %s17, 1
    %p35 = por %p33, %p34
    %p36 = scmp.ne.s32.totalorder %s25, %s26
    %p37 = scmp.eq.s32.totalorder %s17, 0
    %p38 = por %p36, %p37
    %p39 = scmp.ne.s32.totalorder %s25, %s26
    %p40 = scmp.eq.s32.totalorder %s18, 1
    %p41 = por %p39, %p40
    %p43 = scmp.ne.s32.totalorder %s26, %s42
    %p44 = scmp.eq.s32.totalorder %s18, 0
    %p45 = por %p43, %p44
    %s46 = ssub.s32 %s12, %s19
    %p47 = scmp.eq.s32.totalorder %s46, 0
    %s49 = sadd.s32 %s48, 1
    %s50 = scalar_select %p47, %s48, %s49
    %p53 = pneg %p47
    %p54 = scmp.eq.s32.totalorder %s12, 1
    %p55 = por %p53, %p54
    %p56 = scmp.ne.s32.totalorder %s48, %s51
    %p57 = scmp.eq.s32.totalorder %s12, 0
    %p58 = por %p56, %p57
    %p59 = scmp.ne.s32.totalorder %s48, %s51
    %p60 = scmp.eq.s32.totalorder %s17, 1
    %p61 = por %p59, %p60
    %p62 = scmp.ne.s32.totalorder %s51, %s52
    %p63 = scmp.eq.s32.totalorder %s17, 0
    %p64 = por %p62, %p63
    %p65 = scmp.ne.s32.totalorder %s51, %s52
    %p66 = scmp.eq.s32.totalorder %s18, 1
    %p67 = por %p65, %p66
    %p69 = scmp.ne.s32.totalorder %s52, %s68
    %p70 = scmp.eq.s32.totalorder %s18, 0
    %p71 = por %p69, %p70
    %s72 = ssub.s32 %s12, %s19
    %p73 = scmp.eq.s32.totalorder %s72, 0
    %s75 = sadd.s32 %s74, 1
    %s76 = scalar_select %p73, %s74, %s75
    %p79 = pneg %p73
    %p80 = scmp.eq.s32.totalorder %s12, 1
    %p81 = por %p79, %p80
    %p82 = scmp.ne.s32.totalorder %s74, %s77
    %p83 = scmp.eq.s32.totalorder %s12, 0
    %p84 = por %p82, %p83
    %p85 = scmp.ne.s32.totalorder %s74, %s77
    %p86 = scmp.eq.s32.totalorder %s17, 1
    %p87 = por %p85, %p86
    %p88 = scmp.ne.s32.totalorder %s77, %s78
    %p89 = scmp.eq.s32.totalorder %s17, 0
    %p90 = por %p88, %p89
    %p91 = scmp.ne.s32.totalorder %s77, %s78
    %p92 = scmp.eq.s32.totalorder %s18, 1
    %p93 = por %p91, %p92
    %p95 = scmp.ne.s32.totalorder %s78, %s94
    %p96 = scmp.eq.s32.totalorder %s18, 0
    %p97 = por %p95, %p96
    %s98 = ssub.s32 %s12, %s19
    %p99 = scmp.eq.s32.totalorder %s98, 0
    %s101 = sadd.s32 %s100, 1
    %s102 = scalar_select %p99, %s100, %s101
    %p105 = pneg %p99
    %p106 = scmp.eq.s32.totalorder %s12, 1
    %p107 = por %p105, %p106
    %p108 = scmp.ne.s32.totalorder %s100, %s103
    %p109 = scmp.eq.s32.totalorder %s12, 0
    %p110 = por %p108, %p109
    %p111 = scmp.ne.s32.totalorder %s100, %s103
    %p112 = scmp.eq.s32.totalorder %s17, 1
    %p113 = por %p111, %p112
    %p114 = scmp.ne.s32.totalorder %s103, %s104
    %p115 = scmp.eq.s32.totalorder %s17, 0
    %p116 = por %p114, %p115
    %p117 = scmp.ne.s32.totalorder %s103, %s104
    %p118 = scmp.eq.s32.totalorder %s18, 1
    %p119 = por %p117, %p118
    %p121 = scmp.ne.s32.totalorder %s104, %s120
    %p122 = scmp.eq.s32.totalorder %s18, 0
    %p123 = por %p121, %p122
    %s125 = sadd.s32 %s124, 1
    %p128 = scmp.eq.s32.totalorder %s12, 1
    %p129 = scmp.ne.s32.totalorder %s124, %s126
    %p130 = scmp.eq.s32.totalorder %s12, 0
    %p131 = por %p129, %p130
    %p132 = scmp.ne.s32.totalorder %s124, %s126
    %p133 = scmp.eq.s32.totalorder %s17, 1
    %p134 = por %p132, %p133
    %p135 = scmp.ne.s32.totalorder %s126, %s127
    %p136 = scmp.eq.s32.totalorder %s17, 0
    %p137 = por %p135, %p136
    %p138 = scmp.ne.s32.totalorder %s126, %s127
    %p139 = scmp.eq.s32.totalorder %s18, 1
    %p140 = por %p138, %p139
    %p142 = scmp.ne.s32.totalorder %s127, %s141
    %p143 = scmp.eq.s32.totalorder %s18, 0
    %p144 = por %p142, %p143
    %s146 = sadd.s32 %s145, 1
    %p149 = scmp.eq.s32.totalorder %s12, 1
    %p150 = scmp.ne.s32.totalorder %s145, %s147
    %p151 = scmp.eq.s32.totalorder %s12, 0
    %p152 = por %p150, %p151
    %p153 = scmp.ne.s32.totalorder %s145, %s147
    %p154 = scmp.eq.s32.totalorder %s17, 1
    %p155 = por %p153, %p154
    %p156 = scmp.ne.s32.totalorder %s147, %s148
    %p157 = scmp.eq.s32.totalorder %s17, 0
    %p158 = por %p156, %p157
    %p159 = scmp.ne.s32.totalorder %s147, %s148
    %p160 = scmp.eq.s32.totalorder %s18, 1
    %p161 = por %p159, %p160
    %p163 = scmp.ne.s32.totalorder %s148, %s162
    %p164 = scmp.eq.s32.totalorder %s18, 0
    %p165 = por %p163, %p164
    %s166 = ssub.s32 %s12, %s19
    %p167 = scmp.eq.s32.totalorder %s166, 0
    %s169 = sadd.s32 %s168, 1
    %s170 = scalar_select %p167, %s168, %s169
    %p173 = pneg %p167
    %p174 = scmp.eq.s32.totalorder %s12, 1
    %p175 = por %p173, %p174
    %p176 = scmp.ne.s32.totalorder %s168, %s171
    %p177 = scmp.eq.s32.totalorder %s12, 0
    %p178 = por %p176, %p177
    %p179 = scmp.ne.s32.totalorder %s168, %s171
    %p180 = scmp.eq.s32.totalorder %s17, 1
    %p181 = por %p179, %p180
    %p182 = scmp.ne.s32.totalorder %s171, %s172
    %p183 = scmp.eq.s32.totalorder %s17, 0
    %p184 = por %p182, %p183
    %p185 = scmp.ne.s32.totalorder %s171, %s172
    %p186 = scmp.eq.s32.totalorder %s18, 1
    %p187 = por %p185, %p186
    %p189 = scmp.ne.s32.totalorder %s172, %s188
    %p190 = scmp.eq.s32.totalorder %s18, 0
    %p191 = por %p189, %p190
    %p192 = scmp.le.s32.totalorder 1, %s12
    %p193 = scmp.lt.s32.totalorder %s12, 3
    %p194 = pnand %p192, %p193
    %p195 = pneg %p194
    // Predicated region
    $region9: #{forward.3} parent=5 // pred_check
      _
    $region10: #{forward.3} parent=5 // pred_check_branch
      %197 = sbr.rel (%p194) target = $region12
    $region11: #{forward.3} parent=5 // pred_region
      %s198 = ssub.s32 %s12, 1
      // Predicated region
      $region13: #{forward.3} parent=11 // pred_check
        %p199 = pneg %p137
      $region14: #{forward.3} parent=11 // pred_check_branch
        %201 = sbr.rel (%p199) target = $region16
      $region15: #{forward.3} parent=11 // pred_region
        _
      $region16: #{forward.3} parent=11 // pred_fallthru
        _
      // Predicated region
      $region17: #{forward.3} parent=11 // pred_check
        %p202 = pneg %p158
      $region18: #{forward.3} parent=11 // pred_check_branch
        %204 = sbr.rel (%p202) target = $region20
      $region19: #{forward.3} parent=11 // pred_region
        _
      $region20: #{forward.3} parent=11 // pred_fallthru
        _
    $region12: #{forward.3} parent=5 // pred_fallthru
      _
    %p205 = scmp.lt.s32.totalorder %s12, 2
    // Predicated region
    $region21: #{forward.3} parent=5 // pred_check
      %p206 = pneg %p205
    $region22: #{forward.3} parent=5 // pred_check_branch
      %208 = sbr.rel (%p206) target = $region24
    $region23: #{forward.3} parent=5 // pred_region
      // Predicated region
      $region25: #{forward.3} parent=23 // pred_check
        %p209 = pneg %p32
      $region26: #{forward.3} parent=23 // pred_check_branch
        %211 = sbr.rel (%p209) target = $region28
      $region27: #{forward.3} parent=23 // pred_region
        %p212 = scmp.lt.s32.totalorder %s12, 1
        %s213 = scalar_select %p212, %s12, 1
        %s214 = smul.addr %s213, 25
        %s215 = smul.addr %s214, 4
        %s216 = scalar_lea.vmem %s0, %s215
      $region28: #{forward.3} parent=23 // pred_fallthru
        _
      // Predicated region
      $region29: #{forward.3} parent=23 // pred_check
        %p217 = pneg %p58
      $region30: #{forward.3} parent=23 // pred_check_branch
        %219 = sbr.rel (%p217) target = $region32
      $region31: #{forward.3} parent=23 // pred_region
        %p220 = scmp.lt.s32.totalorder %s12, 1
        %s221 = scalar_select %p220, %s12, 1
        %s222 = smul.addr %s221, 25
        %s223 = smul.addr %s222, 4
        %s224 = scalar_lea.vmem %s1, %s223
      $region32: #{forward.3} parent=23 // pred_fallthru
        _
      // Predicated region
      $region33: #{forward.3} parent=23 // pred_check
        %p225 = pneg %p84
      $region34: #{forward.3} parent=23 // pred_check_branch
        %227 = sbr.rel (%p225) target = $region36
      $region35: #{forward.3} parent=23 // pred_region
        %p228 = scmp.lt.s32.totalorder %s12, 1
        %s229 = scalar_select %p228, %s12, 1
        %s230 = smul.addr %s229, 25
        %s231 = smul.addr %s230, 4
        %s232 = scalar_lea.vmem %s2, %s231
      $region36: #{forward.3} parent=23 // pred_fallthru
        _
      // Predicated region
      $region37: #{forward.3} parent=23 // pred_check
        %p233 = pneg %p110
      $region38: #{forward.3} parent=23 // pred_check_branch
        %235 = sbr.rel (%p233) target = $region40
      $region39: #{forward.3} parent=23 // pred_region
        %p236 = scmp.lt.s32.totalorder %s12, 1
        %s237 = scalar_select %p236, %s12, 1
        %s238 = smul.addr %s237, 25
        %s239 = smul.addr %s238, 4
        %s240 = scalar_lea.vmem %s3, %s239
      $region40: #{forward.3} parent=23 // pred_fallthru
        _
    $region24: #{forward.3} parent=5 // pred_fallthru
      _
    %p241 = scmp.le.s32.totalorder 1, %s12
    %p242 = scmp.lt.s32.totalorder %s12, 3
    %p243 = pnand %p241, %p242
    %p244 = pneg %p243
    // Predicated region
    $region41: #{forward.3} parent=5 // pred_check
      _
    $region42: #{forward.3} parent=5 // pred_check_branch
      %246 = sbr.rel (%p243) target = $region44
    $region43: #{forward.3} parent=5 // pred_region
      %s247 = ssub.s32 %s12, 1
      %p248 = scmp.lt.s32.totalorder %s17, 1
      %s249 = scalar_select %p248, %s17, 1
      %s250 = smul.addr %s249, 25
      %s251 = smul.addr %s250, 4
      %s252 = scalar_lea.vmem %s0, %s251
      %p253 = pneg %p38
      %p254 = pneg %p35
      %p255 = scmp.lt.s32.totalorder %s17, 1
      %s256 = scalar_select %p255, %s17, 1
      %s257 = smul.addr %s256, 25
      %s258 = smul.addr %s257, 4
      %s259 = scalar_lea.vmem %s1, %s258
      %p260 = pneg %p64
      %p261 = pneg %p61
      %p262 = scmp.lt.s32.totalorder %s17, 1
      %s263 = scalar_select %p262, %s17, 1
      %s264 = smul.addr %s263, 25
      %s265 = smul.addr %s264, 4
      %s266 = scalar_lea.vmem %s2, %s265
      %p267 = pneg %p90
      %p268 = pneg %p87
      %p269 = scmp.lt.s32.totalorder %s17, 1
      %s270 = scalar_select %p269, %s17, 1
      %s271 = smul.addr %s270, 25
      %s272 = smul.addr %s271, 4
      %s273 = scalar_lea.vmem %s3, %s272
      %p274 = pneg %p116
      %p275 = pneg %p113
      %p276 = pneg %p137
      %p277 = pneg %p134
      %p278 = pneg %p158
      %p279 = pneg %p155
      %p280 = pneg %p184
      %p281 = pneg %p181
      %p282 = scmp.lt.s32.totalorder %s17, 1
      %s283 = scalar_select %p282, %s17, 1
      %s284 = smul.addr %s283, 25
      %s285 = smul.addr %s284, 4
      %s286 = scalar_lea.vmem %s6, %s285
      %p287 = scmp.lt.s32.totalorder %s17, 1
      %s288 = scalar_select %p287, %s17, 1
      %s289 = smul.addr %s288, 25
      %s290 = smul.addr %s289, 4
      %s291 = scalar_lea.vmem %s0, %s290
      %p292 = scmp.lt.s32.totalorder %s17, 1
      %s293 = scalar_select %p292, %s17, 1
      %s294 = smul.addr %s293, 25
      %s295 = smul.addr %s294, 4
      %s296 = scalar_lea.vmem %s1, %s295
      %p297 = scmp.lt.s32.totalorder %s17, 1
      %s298 = scalar_select %p297, %s17, 1
      %s299 = smul.addr %s298, 25
      %s300 = smul.addr %s299, 4
      %s301 = scalar_lea.vmem %s2, %s300
      %p302 = scmp.lt.s32.totalorder %s17, 1
      %s303 = scalar_select %p302, %s17, 1
      %s304 = smul.addr %s303, 25
      %s305 = smul.addr %s304, 4
      %s306 = scalar_lea.vmem %s3, %s305
      %p307 = scmp.lt.s32.totalorder %s17, 1
      %s308 = scalar_select %p307, %s17, 1
      %s309 = smul.addr %s308, 25
      %s310 = smul.addr %s309, 4
      %s311 = scalar_lea.vmem %s6, %s310
      %v313 = vld [vmem:[%s4] sm:$0xf]
      %v314 = vld [vmem:[%s4 + $0x4] sm:$0xf]
      %v315 = vld [vmem:[%s4 + $0x8] sm:$0xf]
      %v316 = vld [vmem:[%s4 + $0xc] sm:$0xf]
      %v317 = vld [vmem:[%s4 + $0x10] sm:$0xf]
      %v318 = vld [vmem:[%s4 + $0x14] sm:$0xf]
      %v319 = vld [vmem:[%s4 + $0x18] sm:$0xf]
      %v320 = vld [vmem:[%s4 + $0x1c] sm:$0xf]
      %v321 = vld [vmem:[%s4 + $0x20] sm:$0xf]
      %v322 = vld [vmem:[%s4 + $0x24] sm:$0xf]
      %v323 = vld [vmem:[%s4 + $0x28] sm:$0xf]
      %v324 = vld [vmem:[%s4 + $0x2c] sm:$0xf]
      %v325 = vld [vmem:[%s4 + $0x30] sm:$0xf]
      %v326 = vld [vmem:[%s4 + $0x34] sm:$0xf]
      %v327 = vld [vmem:[%s4 + $0x38] sm:$0xf]
      %v328 = vld [vmem:[%s4 + $0x3c] sm:$0xf]
      %v329 = vld [vmem:[%s291] sm:$0xf]
      %v330 = vld [vmem:[%s291 + $0x4] sm:$0xf]
      %v331 = vld [vmem:[%s291 + $0x8] sm:$0xf]
      %v332 = vld [vmem:[%s291 + $0xc] sm:$0xf]
      %v333 = vld [vmem:[%s291 + $0x10] sm:$0xf]
      %v334 = vld [vmem:[%s291 + $0x14] sm:$0xf]
      %v335 = vld [vmem:[%s291 + $0x18] sm:$0xf]
      %v336 = vld [vmem:[%s291 + $0x1c] sm:$0xf]
      %v337 = vld [vmem:[%s291 + $0x20] sm:$0xf]
      %v338 = vld [vmem:[%s291 + $0x24] sm:$0xf]
      %v339 = vld [vmem:[%s291 + $0x28] sm:$0xf]
      %v340 = vld [vmem:[%s291 + $0x2c] sm:$0xf]
      %v341 = vld [vmem:[%s291 + $0x30] sm:$0xf]
      %v342 = vld [vmem:[%s291 + $0x34] sm:$0xf]
      %v343 = vld [vmem:[%s291 + $0x38] sm:$0xf]
      %v344 = vld [vmem:[%s291 + $0x3c] sm:$0xf]
      %v345 = vld [vmem:[%s291 + $0x40] sm:$0xf]
      %v346 = vld [vmem:[%s291 + $0x44] sm:$0xf]
      %v347 = vld [vmem:[%s291 + $0x48] sm:$0xf]
      %v348 = vld [vmem:[%s291 + $0x4c] sm:$0xf]
      %v349 = vld [vmem:[%s291 + $0x50] sm:$0xf]
      %v350 = vld [vmem:[%s291 + $0x54] sm:$0xf]
      %v351 = vld [vmem:[%s291 + $0x58] sm:$0xf]
      %v352 = vld [vmem:[%s291 + $0x5c] sm:$0xf]
      %v353 = vld [vmem:[%s291 + $0x60] sm:$0x3]
      %v379 = vunpack.c.l.b16 %v329
      %v380 = vunpack.c.l.b16 %v330
      %v381 = vunpack.c.l.b16 %v331
      %v382 = vunpack.c.l.b16 %v332
      %v383 = vunpack.c.l.b16 %v333
      %v384 = vunpack.c.l.b16 %v334
      %v385 = vunpack.c.l.b16 %v335
      %v386 = vunpack.c.l.b16 %v336
      %v387 = vunpack.c.l.b16 %v337
      %v388 = vunpack.c.l.b16 %v338
      %v389 = vunpack.c.l.b16 %v339
      %v390 = vunpack.c.l.b16 %v340
      %v391 = vunpack.c.l.b16 %v341
      %v392 = vunpack.c.l.b16 %v342
      %v393 = vunpack.c.l.b16 %v343
      %v394 = vunpack.c.l.b16 %v344
      %v395 = vunpack.c.l.b16 %v345
      %v396 = vunpack.c.l.b16 %v346
      %v397 = vunpack.c.l.b16 %v347
      %v398 = vunpack.c.l.b16 %v348
      %v399 = vunpack.c.l.b16 %v349
      %v400 = vunpack.c.l.b16 %v350
      %v401 = vunpack.c.l.b16 %v351
      %v402 = vunpack.c.l.b16 %v352
      %v403 = vunpack.c.l.b16 %v353
      %v404 = vpack.c.b16 %v380, %v379
      %v405 = vpack.c.b16 %v382, %v381
      %v406 = vpack.c.b16 %v384, %v383
      %v407 = vpack.c.b16 %v386, %v385
      %v408 = vpack.c.b16 %v388, %v387
      %v409 = vpack.c.b16 %v390, %v389
      %v410 = vpack.c.b16 %v392, %v391
      %v411 = vpack.c.b16 %v394, %v393
      %v412 = vpack.c.b16 %v396, %v395
      %v413 = vpack.c.b16 %v398, %v397
      %v414 = vpack.c.b16 %v400, %v399
      %v415 = vpack.c.b16 %v402, %v401
      %v416 = vpack.c.b16 %v403, %v403
      %v446 = vunpack.c.l.b16 %v313
      %v447 = vunpack.c.l.b16 %v314
      %v448 = vunpack.c.l.b16 %v315
      %v449 = vunpack.c.l.b16 %v316
      %v450 = vunpack.c.l.b16 %v317
      %v451 = vunpack.c.l.b16 %v318
      %v452 = vunpack.c.l.b16 %v319
      %v453 = vunpack.c.l.b16 %v320
      %v454 = vunpack.c.l.b16 %v321
      %v455 = vunpack.c.l.b16 %v322
      %v456 = vunpack.c.l.b16 %v323
      %v457 = vunpack.c.l.b16 %v324
      %v458 = vunpack.c.l.b16 %v325
      %v459 = vunpack.c.l.b16 %v326
      %v460 = vunpack.c.l.b16 %v327
      %v461 = vunpack.c.l.b16 %v328
      %v462 = vpack.c.b16 %v447, %v446
      %v463 = vpack.c.b16 %v449, %v448
      %v464 = vpack.c.b16 %v451, %v450
      %v465 = vpack.c.b16 %v453, %v452
      %v466 = vpack.c.b16 %v455, %v454
      %v467 = vpack.c.b16 %v457, %v456
      %v468 = vpack.c.b16 %v459, %v458
      %v469 = vpack.c.b16 %v461, %v460
      %478 = vmatprep.subr.bf16.mxu0 0
      %479 = vmatpush1.bf16.msra.mxu0 %v462
      %480 = vmatprep.subr.bf16.mxu0 0
      %481 = vmatpush1.bf16.msra.mxu0 %v463
      %482 = vmatprep.subr.bf16.mxu0 0
      %483 = vmatpush1.bf16.msra.mxu0 %v464
      %484 = vmatprep.subr.bf16.mxu0 0
      %485 = vmatpush1.bf16.msra.mxu0 %v465
      %486 = vmatprep.subr.bf16.mxu0 0
      %487 = vmatpush1.bf16.msra.mxu0 %v466
      %488 = vmatprep.subr.bf16.mxu0 0
      %489 = vmatpush1.bf16.msra.mxu0 %v467
      %490 = vmatprep.subr.bf16.mxu0 0
      %491 = vmatpush1.bf16.msra.mxu0 %v468
      %492 = vmatprep.subr.bf16.mxu0 0
      %493 = vmatpush1.bf16.msra.mxu0 %v469
      %494 = vmatprep.subr.bf16.mxu0 0
      %495 = vmatpush1.bf16.msra.mxu0 0
      %496 = vmatprep.subr.bf16.mxu0 0
      %497 = vmatpush1.bf16.msra.mxu0 0
      %498 = vmatprep.subr.bf16.mxu0 0
      %499 = vmatpush1.bf16.msra.mxu0 0
      %500 = vmatprep.subr.bf16.mxu0 0
      %501 = vmatpush1.bf16.msra.mxu0 0
      %502 = vmatprep.subr.bf16.mxu0 0
      %503 = vmatpush1.bf16.msra.mxu0 0
      %504 = vmatprep.subr.bf16.mxu0 0
      %505 = vmatpush1.bf16.msra.mxu0 0
      %506 = vmatprep.subr.bf16.mxu0 0
      %507 = vmatpush1.bf16.msra.mxu0 0
      %508 = vmatprep.subr.bf16.mxu0 0
      %509 = vmatpush1.bf16.msra.mxu0 0
      %510 = vmatprep.mubr.bf16.mxu0 0
      %511 = vmatmul.mubr.bf16.gmra.mrb[0].mxu0 %v404
      %v512 = vpop.f32.mrb[0].mxu0
      %v513 = vadd.f32 0.0, %v512
      %v514 = vpop.f32.mrb[0].mxu0
      %v515 = vpop.f32.mrb[0].mxu0
      %v516 = vadd.f32 0.0, %v515
      %v517 = vpop.f32.mrb[0].mxu0
      %518 = vmatprep.mubr.bf16.mxu0 0
      %519 = vmatmul.mubr.bf16.gmra.mrb[0].mxu0 %v405
      %v520 = vpop.f32.mrb[0].mxu0
      %v521 = vadd.f32 0.0, %v520
      %v522 = vpop.f32.mrb[0].mxu0
      %v523 = vpop.f32.mrb[0].mxu0
      %v524 = vadd.f32 0.0, %v523
      %v525 = vpop.f32.mrb[0].mxu0
      %526 = vmatprep.mubr.bf16.mxu0 0
      %527 = vmatmul.mubr.bf16.gmra.mrb[0].mxu0 %v406
      %v528 = vpop.f32.mrb[0].mxu0
      %v529 = vadd.f32 0.0, %v528
      %v530 = vpop.f32.mrb[0].mxu0
      %v531 = vpop.f32.mrb[0].mxu0
      %v532 = vadd.f32 0.0, %v531
      %v533 = vpop.f32.mrb[0].mxu0
      %534 = vmatprep.mubr.bf16.mxu0 0
      %535 = vmatmul.mubr.bf16.gmra.mrb[0].mxu0 %v407
      %v536 = vpop.f32.mrb[0].mxu0
      %v537 = vadd.f32 0.0, %v536
      %v538 = vpop.f32.mrb[0].mxu0
      %v539 = vpop.f32.mrb[0].mxu0
      %v540 = vadd.f32 0.0, %v539
      %v541 = vpop.f32.mrb[0].mxu0
      %542 = vmatprep.mubr.bf16.mxu0 0
      %543 = vmatmul.mubr.bf16.gmra.mrb[0].mxu0 %v408
      %v544 = vpop.f32.mrb[0].mxu0
      %v545 = vadd.f32 0.0, %v544
      %v546 = vpop.f32.mrb[0].mxu0
      %v547 = vpop.f32.mrb[0].mxu0
      %v548 = vadd.f32 0.0, %v547
      %v549 = vpop.f32.mrb[0].mxu0
      %550 = vmatprep.mubr.bf16.mxu0 0
      %551 = vmatmul.mubr.bf16.gmra.mrb[0].mxu0 %v409
      %v552 = vpop.f32.mrb[0].mxu0
      %v553 = vadd.f32 0.0, %v552
      %v554 = vpop.f32.mrb[0].mxu0
      %v555 = vpop.f32.mrb[0].mxu0
      %v556 = vadd.f32 0.0, %v555
      %v557 = vpop.f32.mrb[0].mxu0
      %558 = vmatprep.mubr.bf16.mxu0 0
      %559 = vmatmul.mubr.bf16.gmra.mrb[0].mxu0 %v410
      %v560 = vpop.f32.mrb[0].mxu0
      %v561 = vadd.f32 0.0, %v560
      %v562 = vpop.f32.mrb[0].mxu0
      %v563 = vpop.f32.mrb[0].mxu0
      %v564 = vadd.f32 0.0, %v563
      %v565 = vpop.f32.mrb[0].mxu0
      %566 = vmatprep.mubr.bf16.mxu0 0
      %567 = vmatmul.mubr.bf16.gmra.mrb[0].mxu0 %v411
      %v568 = vpop.f32.mrb[0].mxu0
      %v569 = vadd.f32 0.0, %v568
      %v570 = vpop.f32.mrb[0].mxu0
      %v571 = vpop.f32.mrb[0].mxu0
      %v572 = vadd.f32 0.0, %v571
      %v573 = vpop.f32.mrb[0].mxu0
      %574 = vmatprep.mubr.bf16.mxu0 0
      %575 = vmatmul.mubr.bf16.gmra.mrb[0].mxu0 %v412
      %v576 = vpop.f32.mrb[0].mxu0
      %v577 = vadd.f32 0.0, %v576
      %v578 = vpop.f32.mrb[0].mxu0
      %v579 = vpop.f32.mrb[0].mxu0
      %v580 = vadd.f32 0.0, %v579
      %v581 = vpop.f32.mrb[0].mxu0
      %582 = vmatprep.mubr.bf16.mxu0 0
      %583 = vmatmul.mubr.bf16.gmra.mrb[0].mxu0 %v413
      %v584 = vpop.f32.mrb[0].mxu0
      %v585 = vadd.f32 0.0, %v584
      %v586 = vpop.f32.mrb[0].mxu0
      %v587 = vpop.f32.mrb[0].mxu0
      %v588 = vadd.f32 0.0, %v587
      %v589 = vpop.f32.mrb[0].mxu0
      %590 = vmatprep.mubr.bf16.mxu0 0
      %591 = vmatmul.mubr.bf16.gmra.mrb[0].mxu0 %v414
      %v592 = vpop.f32.mrb[0].mxu0
      %v593 = vadd.f32 0.0, %v592
      %v594 = vpop.f32.mrb[0].mxu0
      %v595 = vpop.f32.mrb[0].mxu0
      %v596 = vadd.f32 0.0, %v595
      %v597 = vpop.f32.mrb[0].mxu0
      %598 = vmatprep.mubr.bf16.mxu0 0
      %599 = vmatmul.mubr.bf16.gmra.mrb[0].mxu0 %v415
      %v600 = vpop.f32.mrb[0].mxu0
      %v601 = vadd.f32 0.0, %v600
      %v602 = vpop.f32.mrb[0].mxu0
      %v603 = vpop.f32.mrb[0].mxu0
      %v604 = vadd.f32 0.0, %v603
      %v605 = vpop.f32.mrb[0].mxu0
      %606 = vmatprep.mubr.bf16.mxu0 0
      %607 = vmatmul.mubr.bf16.gmra.mrb[0].mxu0 %v416
      %v608 = vpop.f32.mrb[0].mxu0
      %v609 = vadd.f32 0.0, %v608
      %v610 = vpop.f32.mrb[0].mxu0
      %v611 = vpop.f32.mrb[0].mxu0
      %v612 = vpop.f32.mrb[0].mxu0
      %613 = vdwg.mxu0
      %v614 = vld [vmem:[%s296] sm:$0xf]
      %v615 = vld [vmem:[%s296 + $0x4] sm:$0xf]
      %v616 = vld [vmem:[%s296 + $0x8] sm:$0xf]
      %v617 = vld [vmem:[%s296 + $0xc] sm:$0xf]
      %v618 = vld [vmem:[%s296 + $0x10] sm:$0xf]
      %v619 = vld [vmem:[%s296 + $0x14] sm:$0xf]
      %v620 = vld [vmem:[%s296 + $0x18] sm:$0xf]
      %v621 = vld [vmem:[%s296 + $0x1c] sm:$0xf]
      %v622 = vld [vmem:[%s296 + $0x20] sm:$0xf]
      %v623 = vld [vmem:[%s296 + $0x24] sm:$0xf]
      %v624 = vld [vmem:[%s296 + $0x28] sm:$0xf]
      %v625 = vld [vmem:[%s296 + $0x2c] sm:$0xf]
      %v626 = vld [vmem:[%s296 + $0x30] sm:$0xf]
      %v627 = vld [vmem:[%s296 + $0x34] sm:$0xf]
      %v628 = vld [vmem:[%s296 + $0x38] sm:$0xf]
      %v629 = vld [vmem:[%s296 + $0x3c] sm:$0xf]
      %v630 = vld [vmem:[%s296 + $0x40] sm:$0xf]
      %v631 = vld [vmem:[%s296 + $0x44] sm:$0xf]
      %v632 = vld [vmem:[%s296 + $0x48] sm:$0xf]
      %v633 = vld [vmem:[%s296 + $0x4c] sm:$0xf]
      %v634 = vld [vmem:[%s296 + $0x50] sm:$0xf]
      %v635 = vld [vmem:[%s296 + $0x54] sm:$0xf]
      %v636 = vld [vmem:[%s296 + $0x58] sm:$0xf]
      %v637 = vld [vmem:[%s296 + $0x5c] sm:$0xf]
      %v638 = vld [vmem:[%s296 + $0x60] sm:$0x3]
      %v664 = vunpack.c.l.b16 %v614
      %v665 = vunpack.c.l.b16 %v615
      %v666 = vunpack.c.l.b16 %v616
      %v667 = vunpack.c.l.b16 %v617
      %v668 = vunpack.c.l.b16 %v618
      %v669 = vunpack.c.l.b16 %v619
      %v670 = vunpack.c.l.b16 %v620
      %v671 = vunpack.c.l.b16 %v621
      %v672 = vunpack.c.l.b16 %v622
      %v673 = vunpack.c.l.b16 %v623
      %v674 = vunpack.c.l.b16 %v624
      %v675 = vunpack.c.l.b16 %v625
      %v676 = vunpack.c.l.b16 %v626
      %v677 = vunpack.c.l.b16 %v627
      %v678 = vunpack.c.l.b16 %v628
      %v679 = vunpack.c.l.b16 %v629
      %v680 = vunpack.c.l.b16 %v630
      %v681 = vunpack.c.l.b16 %v631
      %v682 = vunpack.c.l.b16 %v632
      %v683 = vunpack.c.l.b16 %v633
      %v684 = vunpack.c.l.b16 %v634
      %v685 = vunpack.c.l.b16 %v635
      %v686 = vunpack.c.l.b16 %v636
      %v687 = vunpack.c.l.b16 %v637
      %v688 = vunpack.c.l.b16 %v638
      %v689 = vpack.c.b16 %v665, %v664
      %v690 = vpack.c.b16 %v667, %v666
      %v691 = vpack.c.b16 %v669, %v668
      %v692 = vpack.c.b16 %v671, %v670
      %v693 = vpack.c.b16 %v673, %v672
      %v694 = vpack.c.b16 %v675, %v674
      %v695 = vpack.c.b16 %v677, %v676
      %v696 = vpack.c.b16 %v679, %v678
      %v697 = vpack.c.b16 %v681, %v680
      %v698 = vpack.c.b16 %v683, %v682
      %v699 = vpack.c.b16 %v685, %v684
      %v700 = vpack.c.b16 %v687, %v686
      %v701 = vpack.c.b16 %v688, %v688
      %715 = vmatprep.subr.bf16.mxu0 0
      %716 = vmatpush1.bf16.msra.mxu0 %v462
      %717 = vmatprep.subr.bf16.mxu0 0
      %718 = vmatpush1.bf16.msra.mxu0 %v463
      %719 = vmatprep.subr.bf16.mxu0 0
      %720 = vmatpush1.bf16.msra.mxu0 %v464
      %721 = vmatprep.subr.bf16.mxu0 0
      %722 = vmatpush1.bf16.msra.mxu0 %v465
      %723 = vmatprep.subr.bf16.mxu0 0
      %724 = vmatpush1.bf16.msra.mxu0 %v466
      %725 = vmatprep.subr.bf16.mxu0 0
      %726 = vmatpush1.bf16.msra.mxu0 %v467
      %727 = vmatprep.subr.bf16.mxu0 0
      %728 = vmatpush1.bf16.msra.mxu0 %v468
      %729 = vmatprep.subr.bf16.mxu0 0
      %730 = vmatpush1.bf16.msra.mxu0 %v469
      %731 = vmatprep.subr.bf16.mxu0 0
      %732 = vmatpush1.bf16.msra.mxu0 0
      %733 = vmatprep.subr.bf16.mxu0 0
      %734 = vmatpush1.bf16.msra.mxu0 0
      %735 = vmatprep.subr.bf16.mxu0 0
      %736 = vmatpush1.bf16.msra.mxu0 0
      %737 = vmatprep.subr.bf16.mxu0 0
      %738 = vmatpush1.bf16.msra.mxu0 0
      %739 = vmatprep.subr.bf16.mxu0 0
      %740 = vmatpush1.bf16.msra.mxu0 0
      %741 = vmatprep.subr.bf16.mxu0 0
      %742 = vmatpush1.bf16.msra.mxu0 0
      %743 = vmatprep.subr.bf16.mxu0 0
      %744 = vmatpush1.bf16.msra.mxu0 0
      %745 = vmatprep.subr.bf16.mxu0 0
      %746 = vmatpush1.bf16.msra.mxu0 0
      %747 = vmatprep.mubr.bf16.mxu0 0
      %748 = vmatmul.mubr.bf16.gmra.mrb[0].mxu0 %v689
      %v749 = vpop.f32.mrb[0].mxu0
      %v750 = vadd.f32 0.0, %v749
      %v751 = vpop.f32.mrb[0].mxu0
      %v752 = vpop.f32.mrb[0].mxu0
      %v753 = vadd.f32 0.0, %v752
      %v754 = vpop.f32.mrb[0].mxu0
      %755 = vmatprep.mubr.bf16.mxu0 0
      %756 = vmatmul.mubr.bf16.gmra.mrb[0].mxu0 %v690
      %v757 = vpop.f32.mrb[0].mxu0
      %v758 = vadd.f32 0.0, %v757
      %v759 = vpop.f32.mrb[0].mxu0
      %v760 = vpop.f32.mrb[0].mxu0
      %v761 = vadd.f32 0.0, %v760
      %v762 = vpop.f32.mrb[0].mxu0
      %763 = vmatprep.mubr.bf16.mxu0 0
      %764 = vmatmul.mubr.bf16.gmra.mrb[0].mxu0 %v691
      %v765 = vpop.f32.mrb[0].mxu0
      %v766 = vadd.f32 0.0, %v765
      %v767 = vpop.f32.mrb[0].mxu0
      %v768 = vpop.f32.mrb[0].mxu0
      %v769 = vadd.f32 0.0, %v768
      %v770 = vpop.f32.mrb[0].mxu0
      %771 = vmatprep.mubr.bf16.mxu0 0
      %772 = vmatmul.mubr.bf16.gmra.mrb[0].mxu0 %v692
      %v773 = vpop.f32.mrb[0].mxu0
      %v774 = vadd.f32 0.0, %v773
      %v775 = vpop.f32.mrb[0].mxu0
      %v776 = vpop.f32.mrb[0].mxu0
      %v777 = vadd.f32 0.0, %v776
      %v778 = vpop.f32.mrb[0].mxu0
      %779 = vmatprep.mubr.bf16.mxu0 0
      %780 = vmatmul.mubr.bf16.gmra.mrb[0].mxu0 %v693
      %v781 = vpop.f32.mrb[0].mxu0
      %v782 = vadd.f32 0.0, %v781
      %v783 = vpop.f32.mrb[0].mxu0
      %v784 = vpop.f32.mrb[0].mxu0
      %v785 = vadd.f32 0.0, %v784
      %v786 = vpop.f32.mrb[0].mxu0
      %787 = vmatprep.mubr.bf16.mxu0 0
      %788 = vmatmul.mubr.bf16.gmra.mrb[0].mxu0 %v694
      %v789 = vpop.f32.mrb[0].mxu0
      %v790 = vadd.f32 0.0, %v789
      %v791 = vpop.f32.mrb[0].mxu0
      %v792 = vpop.f32.mrb[0].mxu0
      %v793 = vadd.f32 0.0, %v792
      %v794 = vpop.f32.mrb[0].mxu0
      %795 = vmatprep.mubr.bf16.mxu0 0
      %796 = vmatmul.mubr.bf16.gmra.mrb[0].mxu0 %v695
      %v797 = vpop.f32.mrb[0].mxu0
      %v798 = vadd.f32 0.0, %v797
      %v799 = vpop.f32.mrb[0].mxu0
      %v800 = vpop.f32.mrb[0].mxu0
      %v801 = vadd.f32 0.0, %v800
      %v802 = vpop.f32.mrb[0].mxu0
      %803 = vmatprep.mubr.bf16.mxu0 0
      %804 = vmatmul.mubr.bf16.gmra.mrb[0].mxu0 %v696
      %v805 = vpop.f32.mrb[0].mxu0
      %v806 = vadd.f32 0.0, %v805
      %v807 = vpop.f32.mrb[0].mxu0
      %v808 = vpop.f32.mrb[0].mxu0
      %v809 = vadd.f32 0.0, %v808
      %v810 = vpop.f32.mrb[0].mxu0
      %811 = vmatprep.mubr.bf16.mxu0 0
      %812 = vmatmul.mubr.bf16.gmra.mrb[0].mxu0 %v697
      %v813 = vpop.f32.mrb[0].mxu0
      %v814 = vadd.f32 0.0, %v813
      %v815 = vpop.f32.mrb[0].mxu0
      %v816 = vpop.f32.mrb[0].mxu0
      %v817 = vadd.f32 0.0, %v816
      %v818 = vpop.f32.mrb[0].mxu0
      %819 = vmatprep.mubr.bf16.mxu0 0
      %820 = vmatmul.mubr.bf16.gmra.mrb[0].mxu0 %v698
      %v821 = vpop.f32.mrb[0].mxu0
      %v822 = vadd.f32 0.0, %v821
      %v823 = vpop.f32.mrb[0].mxu0
      %v824 = vpop.f32.mrb[0].mxu0
      %v825 = vadd.f32 0.0, %v824
      %v826 = vpop.f32.mrb[0].mxu0
      %827 = vmatprep.mubr.bf16.mxu0 0
      %828 = vmatmul.mubr.bf16.gmra.mrb[0].mxu0 %v699
      %v829 = vpop.f32.mrb[0].mxu0
      %v830 = vadd.f32 0.0, %v829
      %v831 = vpop.f32.mrb[0].mxu0
      %v832 = vpop.f32.mrb[0].mxu0
      %v833 = vadd.f32 0.0, %v832
      %v834 = vpop.f32.mrb[0].mxu0
      %835 = vmatprep.mubr.bf16.mxu0 0
      %836 = vmatmul.mubr.bf16.gmra.mrb[0].mxu0 %v700
      %v837 = vpop.f32.mrb[0].mxu0
      %v838 = vadd.f32 0.0, %v837
      %v839 = vpop.f32.mrb[0].mxu0
      %v840 = vpop.f32.mrb[0].mxu0
      %v841 = vadd.f32 0.0, %v840
      %v842 = vpop.f32.mrb[0].mxu0
      %843 = vmatprep.mubr.bf16.mxu0 0
      %844 = vmatmul.mubr.bf16.gmra.mrb[0].mxu0 %v701
      %v845 = vpop.f32.mrb[0].mxu0
      %v846 = vadd.f32 0.0, %v845
      %v847 = vpop.f32.mrb[0].mxu0
      %v848 = vpop.f32.mrb[0].mxu0
      %v849 = vpop.f32.mrb[0].mxu0
      %850 = vdwg.mxu0
      %v851 = vmax.f32 %v513, %v750
      %v852 = vmax.f32 %v516, %v753
      %v853 = vmax.f32 %v521, %v758
      %v854 = vmax.f32 %v524, %v761
      %v855 = vmax.f32 %v529, %v766
      %v856 = vmax.f32 %v532, %v769
      %v857 = vmax.f32 %v537, %v774
      %v858 = vmax.f32 %v540, %v777
      %v859 = vmax.f32 %v545, %v782
      %v860 = vmax.f32 %v548, %v785
      %v861 = vmax.f32 %v553, %v790
      %v862 = vmax.f32 %v556, %v793
      %v863 = vmax.f32 %v561, %v798
      %v864 = vmax.f32 %v564, %v801
      %v865 = vmax.f32 %v569, %v806
      %v866 = vmax.f32 %v572, %v809
      %v867 = vmax.f32 %v577, %v814
      %v868 = vmax.f32 %v580, %v817
      %v869 = vmax.f32 %v585, %v822
      %v870 = vmax.f32 %v588, %v825
      %v871 = vmax.f32 %v593, %v830
      %v872 = vmax.f32 %v596, %v833
      %v873 = vmax.f32 %v601, %v838
      %v874 = vmax.f32 %v604, %v841
      %v875 = vmax.f32 %v609, %v846
      %v876 = vld [vmem:[%s301] sm:$0xf]
      %v877 = vld [vmem:[%s301 + $0x4] sm:$0xf]
      %v878 = vld [vmem:[%s301 + $0x8] sm:$0xf]
      %v879 = vld [vmem:[%s301 + $0xc] sm:$0xf]
      %v880 = vld [vmem:[%s301 + $0x10] sm:$0xf]
      %v881 = vld [vmem:[%s301 + $0x14] sm:$0xf]
      %v882 = vld [vmem:[%s301 + $0x18] sm:$0xf]
      %v883 = vld [vmem:[%s301 + $0x1c] sm:$0xf]
      %v884 = vld [vmem:[%s301 + $0x20] sm:$0xf]
      %v885 = vld [vmem:[%s301 + $0x24] sm:$0xf]
      %v886 = vld [vmem:[%s301 + $0x28] sm:$0xf]
      %v887 = vld [vmem:[%s301 + $0x2c] sm:$0xf]
      %v888 = vld [vmem:[%s301 + $0x30] sm:$0xf]
      %v889 = vld [vmem:[%s301 + $0x34] sm:$0xf]
      %v890 = vld [vmem:[%s301 + $0x38] sm:$0xf]
      %v891 = vld [vmem:[%s301 + $0x3c] sm:$0xf]
      %v892 = vld [vmem:[%s301 + $0x40] sm:$0xf]
      %v893 = vld [vmem:[%s301 + $0x44] sm:$0xf]
      %v894 = vld [vmem:[%s301 + $0x48] sm:$0xf]
      %v895 = vld [vmem:[%s301 + $0x4c] sm:$0xf]
      %v896 = vld [vmem:[%s301 + $0x50] sm:$0xf]
      %v897 = vld [vmem:[%s301 + $0x54] sm:$0xf]
      %v898 = vld [vmem:[%s301 + $0x58] sm:$0xf]
      %v899 = vld [vmem:[%s301 + $0x5c] sm:$0xf]
      %v900 = vld [vmem:[%s301 + $0x60] sm:$0x3]
      %v926 = vunpack.c.l.b16 %v876
      %v927 = vunpack.c.l.b16 %v877
      %v928 = vunpack.c.l.b16 %v878
      %v929 = vunpack.c.l.b16 %v879
      %v930 = vunpack.c.l.b16 %v880
      %v931 = vunpack.c.l.b16 %v881
      %v932 = vunpack.c.l.b16 %v882
      %v933 = vunpack.c.l.b16 %v883
      %v934 = vunpack.c.l.b16 %v884
      %v935 = vunpack.c.l.b16 %v885
      %v936 = vunpack.c.l.b16 %v886
      %v937 = vunpack.c.l.b16 %v887
      %v938 = vunpack.c.l.b16 %v888
      %v939 = vunpack.c.l.b16 %v889
      %v940 = vunpack.c.l.b16 %v890
      %v941 = vunpack.c.l.b16 %v891
      %v942 = vunpack.c.l.b16 %v892
      %v943 = vunpack.c.l.b16 %v893
      %v944 = vunpack.c.l.b16 %v894
      %v945 = vunpack.c.l.b16 %v895
      %v946 = vunpack.c.l.b16 %v896
      %v947 = vunpack.c.l.b16 %v897
      %v948 = vunpack.c.l.b16 %v898
      %v949 = vunpack.c.l.b16 %v899
      %v950 = vunpack.c.l.b16 %v900
      %v951 = vpack.c.b16 %v927, %v926
      %v952 = vpack.c.b16 %v929, %v928
      %v953 = vpack.c.b16 %v931, %v930
      %v954 = vpack.c.b16 %v933, %v932
      %v955 = vpack.c.b16 %v935, %v934
      %v956 = vpack.c.b16 %v937, %v936
      %v957 = vpack.c.b16 %v939, %v938
      %v958 = vpack.c.b16 %v941, %v940
      %v959 = vpack.c.b16 %v943, %v942
      %v960 = vpack.c.b16 %v945, %v944
      %v961 = vpack.c.b16 %v947, %v946
      %v962 = vpack.c.b16 %v949, %v948
      %v963 = vpack.c.b16 %v950, %v950
      %977 = vmatprep.subr.bf16.mxu0 0
      %978 = vmatpush1.bf16.msra.mxu0 %v462
      %979 = vmatprep.subr.bf16.mxu0 0
      %980 = vmatpush1.bf16.msra.mxu0 %v463
      %981 = vmatprep.subr.bf16.mxu0 0
      %982 = vmatpush1.bf16.msra.mxu0 %v464
      %983 = vmatprep.subr.bf16.mxu0 0
      %984 = vmatpush1.bf16.msra.mxu0 %v465
      %985 = vmatprep.subr.bf16.mxu0 0
      %986 = vmatpush1.bf16.msra.mxu0 %v466
      %987 = vmatprep.subr.bf16.mxu0 0
      %988 = vmatpush1.bf16.msra.mxu0 %v467
      %989 = vmatprep.subr.bf16.mxu0 0
      %990 = vmatpush1.bf16.msra.mxu0 %v468
      %991 = vmatprep.subr.bf16.mxu0 0
      %992 = vmatpush1.bf16.msra.mxu0 %v469
      %993 = vmatprep.subr.bf16.mxu0 0
      %994 = vmatpush1.bf16.msra.mxu0 0
      %995 = vmatprep.subr.bf16.mxu0 0
      %996 = vmatpush1.bf16.msra.mxu0 0
      %997 = vmatprep.subr.bf16.mxu0 0
      %998 = vmatpush1.bf16.msra.mxu0 0
      %999 = vmatprep.subr.bf16.mxu0 0
      %1000 = vmatpush1.bf16.msra.mxu0 0
      %1001 = vmatprep.subr.bf16.mxu0 0
      %1002 = vmatpush1.bf16.msra.mxu0 0
      %1003 = vmatprep.subr.bf16.mxu0 0
      %1004 = vmatpush1.bf16.msra.mxu0 0
      %1005 = vmatprep.subr.bf16.mxu0 0
      %1006 = vmatpush1.bf16.msra.mxu0 0
      %1007 = vmatprep.subr.bf16.mxu0 0
      %1008 = vmatpush1.bf16.msra.mxu0 0
      %1009 = vmatprep.mubr.bf16.mxu0 0
      %1010 = vmatmul.mubr.bf16.gmra.mrb[0].mxu0 %v951
      %v1011 = vpop.f32.mrb[0].mxu0
      %v1012 = vadd.f32 0.0, %v1011
      %v1013 = vpop.f32.mrb[0].mxu0
      %v1014 = vpop.f32.mrb[0].mxu0
      %v1015 = vadd.f32 0.0, %v1014
      %v1016 = vpop.f32.mrb[0].mxu0
      %1017 = vmatprep.mubr.bf16.mxu0 0
      %1018 = vmatmul.mubr.bf16.gmra.mrb[0].mxu0 %v952
      %v1019 = vpop.f32.mrb[0].mxu0
      %v1020 = vadd.f32 0.0, %v1019
      %v1021 = vpop.f32.mrb[0].mxu0
      %v1022 = vpop.f32.mrb[0].mxu0
      %v1023 = vadd.f32 0.0, %v1022
      %v1024 = vpop.f32.mrb[0].mxu0
      %1025 = vmatprep.mubr.bf16.mxu0 0
      %1026 = vmatmul.mubr.bf16.gmra.mrb[0].mxu0 %v953
      %v1027 = vpop.f32.mrb[0].mxu0
      %v1028 = vadd.f32 0.0, %v1027
      %v1029 = vpop.f32.mrb[0].mxu0
      %v1030 = vpop.f32.mrb[0].mxu0
      %v1031 = vadd.f32 0.0, %v1030
      %v1032 = vpop.f32.mrb[0].mxu0
      %1033 = vmatprep.mubr.bf16.mxu0 0
      %1034 = vmatmul.mubr.bf16.gmra.mrb[0].mxu0 %v954
      %v1035 = vpop.f32.mrb[0].mxu0
      %v1036 = vadd.f32 0.0, %v1035
      %v1037 = vpop.f32.mrb[0].mxu0
      %v1038 = vpop.f32.mrb[0].mxu0
      %v1039 = vadd.f32 0.0, %v1038
      %v1040 = vpop.f32.mrb[0].mxu0
      %1041 = vmatprep.mubr.bf16.mxu0 0
      %1042 = vmatmul.mubr.bf16.gmra.mrb[0].mxu0 %v955
      %v1043 = vpop.f32.mrb[0].mxu0
      %v1044 = vadd.f32 0.0, %v1043
      %v1045 = vpop.f32.mrb[0].mxu0
      %v1046 = vpop.f32.mrb[0].mxu0
      %v1047 = vadd.f32 0.0, %v1046
      %v1048 = vpop.f32.mrb[0].mxu0
      %1049 = vmatprep.mubr.bf16.mxu0 0
      %1050 = vmatmul.mubr.bf16.gmra.mrb[0].mxu0 %v956
      %v1051 = vpop.f32.mrb[0].mxu0
      %v1052 = vadd.f32 0.0, %v1051
      %v1053 = vpop.f32.mrb[0].mxu0
      %v1054 = vpop.f32.mrb[0].mxu0
      %v1055 = vadd.f32 0.0, %v1054
      %v1056 = vpop.f32.mrb[0].mxu0
      %1057 = vmatprep.mubr.bf16.mxu0 0
      %1058 = vmatmul.mubr.bf16.gmra.mrb[0].mxu0 %v957
      %v1059 = vpop.f32.mrb[0].mxu0
      %v1060 = vadd.f32 0.0, %v1059
      %v1061 = vpop.f32.mrb[0].mxu0
      %v1062 = vpop.f32.mrb[0].mxu0
      %v1063 = vadd.f32 0.0, %v1062
      %v1064 = vpop.f32.mrb[0].mxu0
      %1065 = vmatprep.mubr.bf16.mxu0 0
      %1066 = vmatmul.mubr.bf16.gmra.mrb[0].mxu0 %v958
      %v1067 = vpop.f32.mrb[0].mxu0
      %v1068 = vadd.f32 0.0, %v1067
      %v1069 = vpop.f32.mrb[0].mxu0
      %v1070 = vpop.f32.mrb[0].mxu0
      %v1071 = vadd.f32 0.0, %v1070
      %v1072 = vpop.f32.mrb[0].mxu0
      %1073 = vmatprep.mubr.bf16.mxu0 0
      %1074 = vmatmul.mubr.bf16.gmra.mrb[0].mxu0 %v959
      %v1075 = vpop.f32.mrb[0].mxu0
      %v1076 = vadd.f32 0.0, %v1075
      %v1077 = vpop.f32.mrb[0].mxu0
      %v1078 = vpop.f32.mrb[0].mxu0
      %v1079 = vadd.f32 0.0, %v1078
      %v1080 = vpop.f32.mrb[0].mxu0
      %1081 = vmatprep.mubr.bf16.mxu0 0
      %1082 = vmatmul.mubr.bf16.gmra.mrb[0].mxu0 %v960
      %v1083 = vpop.f32.mrb[0].mxu0
      %v1084 = vadd.f32 0.0, %v1083
      %v1085 = vpop.f32.mrb[0].mxu0
      %v1086 = vpop.f32.mrb[0].mxu0
      %v1087 = vadd.f32 0.0, %v1086
      %v1088 = vpop.f32.mrb[0].mxu0
      %1089 = vmatprep.mubr.bf16.mxu0 0
      %1090 = vmatmul.mubr.bf16.gmra.mrb[0].mxu0 %v961
      %v1091 = vpop.f32.mrb[0].mxu0
      %v1092 = vadd.f32 0.0, %v1091
      %v1093 = vpop.f32.mrb[0].mxu0
      %v1094 = vpop.f32.mrb[0].mxu0
      %v1095 = vadd.f32 0.0, %v1094
      %v1096 = vpop.f32.mrb[0].mxu0
      %1097 = vmatprep.mubr.bf16.mxu0 0
      %1098 = vmatmul.mubr.bf16.gmra.mrb[0].mxu0 %v962
      %v1099 = vpop.f32.mrb[0].mxu0
      %v1100 = vadd.f32 0.0, %v1099
      %v1101 = vpop.f32.mrb[0].mxu0
      %v1102 = vpop.f32.mrb[0].mxu0
      %v1103 = vadd.f32 0.0, %v1102
      %v1104 = vpop.f32.mrb[0].mxu0
      %1105 = vmatprep.mubr.bf16.mxu0 0
      %1106 = vmatmul.mubr.bf16.gmra.mrb[0].mxu0 %v963
      %v1107 = vpop.f32.mrb[0].mxu0
      %v1108 = vadd.f32 0.0, %v1107
      %v1109 = vpop.f32.mrb[0].mxu0
      %v1110 = vpop.f32.mrb[0].mxu0
      %v1111 = vpop.f32.mrb[0].mxu0
      %1112 = vdwg.mxu0
      %v1113 = vld [vmem:[%s306] sm:$0xf]
      %v1114 = vld [vmem:[%s306 + $0x4] sm:$0xf]
      %v1115 = vld [vmem:[%s306 + $0x8] sm:$0xf]
      %v1116 = vld [vmem:[%s306 + $0xc] sm:$0xf]
      %v1117 = vld [vmem:[%s306 + $0x10] sm:$0xf]
      %v1118 = vld [vmem:[%s306 + $0x14] sm:$0xf]
      %v1119 = vld [vmem:[%s306 + $0x18] sm:$0xf]
      %v1120 = vld [vmem:[%s306 + $0x1c] sm:$0xf]
      %v1121 = vld [vmem:[%s306 + $0x20] sm:$0xf]
      %v1122 = vld [vmem:[%s306 + $0x24] sm:$0xf]
      %v1123 = vld [vmem:[%s306 + $0x28] sm:$0xf]
      %v1124 = vld [vmem:[%s306 + $0x2c] sm:$0xf]
      %v1125 = vld [vmem:[%s306 + $0x30] sm:$0xf]
      %v1126 = vld [vmem:[%s306 + $0x34] sm:$0xf]
      %v1127 = vld [vmem:[%s306 + $0x38] sm:$0xf]
      %v1128 = vld [vmem:[%s306 + $0x3c] sm:$0xf]
      %v1129 = vld [vmem:[%s306 + $0x40] sm:$0xf]
      %v1130 = vld [vmem:[%s306 + $0x44] sm:$0xf]
      %v1131 = vld [vmem:[%s306 + $0x48] sm:$0xf]
      %v1132 = vld [vmem:[%s306 + $0x4c] sm:$0xf]
      %v1133 = vld [vmem:[%s306 + $0x50] sm:$0xf]
      %v1134 = vld [vmem:[%s306 + $0x54] sm:$0xf]
      %v1135 = vld [vmem:[%s306 + $0x58] sm:$0xf]
      %v1136 = vld [vmem:[%s306 + $0x5c] sm:$0xf]
      %v1137 = vld [vmem:[%s306 + $0x60] sm:$0x3]
      %v1163 = vunpack.c.l.b16 %v1113
      %v1164 = vunpack.c.l.b16 %v1114
      %v1165 = vunpack.c.l.b16 %v1115
      %v1166 = vunpack.c.l.b16 %v1116
      %v1167 = vunpack.c.l.b16 %v1117
      %v1168 = vunpack.c.l.b16 %v1118
      %v1169 = vunpack.c.l.b16 %v1119
      %v1170 = vunpack.c.l.b16 %v1120
      %v1171 = vunpack.c.l.b16 %v1121
      %v1172 = vunpack.c.l.b16 %v1122
      %v1173 = vunpack.c.l.b16 %v1123
      %v1174 = vunpack.c.l.b16 %v1124
      %v1175 = vunpack.c.l.b16 %v1125
      %v1176 = vunpack.c.l.b16 %v1126
      %v1177 = vunpack.c.l.b16 %v1127
      %v1178 = vunpack.c.l.b16 %v1128
      %v1179 = vunpack.c.l.b16 %v1129
      %v1180 = vunpack.c.l.b16 %v1130
      %v1181 = vunpack.c.l.b16 %v1131
      %v1182 = vunpack.c.l.b16 %v1132
      %v1183 = vunpack.c.l.b16 %v1133
      %v1184 = vunpack.c.l.b16 %v1134
      %v1185 = vunpack.c.l.b16 %v1135
      %v1186 = vunpack.c.l.b16 %v1136
      %v1187 = vunpack.c.l.b16 %v1137
      %v1188 = vpack.c.b16 %v1164, %v1163
      %v1189 = vpack.c.b16 %v1166, %v1165
      %v1190 = vpack.c.b16 %v1168, %v1167
      %v1191 = vpack.c.b16 %v1170, %v1169
      %v1192 = vpack.c.b16 %v1172, %v1171
      %v1193 = vpack.c.b16 %v1174, %v1173
      %v1194 = vpack.c.b16 %v1176, %v1175
      %v1195 = vpack.c.b16 %v1178, %v1177
      %v1196 = vpack.c.b16 %v1180, %v1179
      %v1197 = vpack.c.b16 %v1182, %v1181
      %v1198 = vpack.c.b16 %v1184, %v1183
      %v1199 = vpack.c.b16 %v1186, %v1185
      %v1200 = vpack.c.b16 %v1187, %v1187
      %1214 = vmatprep.subr.bf16.mxu0 0
      %1215 = vmatpush1.bf16.msra.mxu0 %v462
      %1216 = vmatprep.subr.bf16.mxu0 0
      %1217 = vmatpush1.bf16.msra.mxu0 %v463
      %1218 = vmatprep.subr.bf16.mxu0 0
      %1219 = vmatpush1.bf16.msra.mxu0 %v464
      %1220 = vmatprep.subr.bf16.mxu0 0
      %1221 = vmatpush1.bf16.msra.mxu0 %v465
      %1222 = vmatprep.subr.bf16.mxu0 0
      %1223 = vmatpush1.bf16.msra.mxu0 %v466
      %1224 = vmatprep.subr.bf16.mxu0 0
      %1225 = vmatpush1.bf16.msra.mxu0 %v467
      %1226 = vmatprep.subr.bf16.mxu0 0
      %1227 = vmatpush1.bf16.msra.mxu0 %v468
      %1228 = vmatprep.subr.bf16.mxu0 0
      %1229 = vmatpush1.bf16.msra.mxu0 %v469
      %1230 = vmatprep.subr.bf16.mxu0 0
      %1231 = vmatpush1.bf16.msra.mxu0 0
      %1232 = vmatprep.subr.bf16.mxu0 0
      %1233 = vmatpush1.bf16.msra.mxu0 0
      %1234 = vmatprep.subr.bf16.mxu0 0
      %1235 = vmatpush1.bf16.msra.mxu0 0
      %1236 = vmatprep.subr.bf16.mxu0 0
      %1237 = vmatpush1.bf16.msra.mxu0 0
      %1238 = vmatprep.subr.bf16.mxu0 0
      %1239 = vmatpush1.bf16.msra.mxu0 0
      %1240 = vmatprep.subr.bf16.mxu0 0
      %1241 = vmatpush1.bf16.msra.mxu0 0
      %1242 = vmatprep.subr.bf16.mxu0 0
      %1243 = vmatpush1.bf16.msra.mxu0 0
      %1244 = vmatprep.subr.bf16.mxu0 0
      %1245 = vmatpush1.bf16.msra.mxu0 0
      %1246 = vmatprep.mubr.bf16.mxu0 0
      %1247 = vmatmul.mubr.bf16.gmra.mrb[0].mxu0 %v1188
      %v1248 = vpop.f32.mrb[0].mxu0
      %v1249 = vadd.f32 0.0, %v1248
      %v1250 = vpop.f32.mrb[0].mxu0
      %v1251 = vpop.f32.mrb[0].mxu0
      %v1252 = vadd.f32 0.0, %v1251
      %v1253 = vpop.f32.mrb[0].mxu0
      %1254 = vmatprep.mubr.bf16.mxu0 0
      %1255 = vmatmul.mubr.bf16.gmra.mrb[0].mxu0 %v1189
      %v1256 = vpop.f32.mrb[0].mxu0
      %v1257 = vadd.f32 0.0, %v1256
      %v1258 = vpop.f32.mrb[0].mxu0
      %v1259 = vpop.f32.mrb[0].mxu0
      %v1260 = vadd.f32 0.0, %v1259
      %v1261 = vpop.f32.mrb[0].mxu0
      %1262 = vmatprep.mubr.bf16.mxu0 0
      %1263 = vmatmul.mubr.bf16.gmra.mrb[0].mxu0 %v1190
      %v1264 = vpop.f32.mrb[0].mxu0
      %v1265 = vadd.f32 0.0, %v1264
      %v1266 = vpop.f32.mrb[0].mxu0
      %v1267 = vpop.f32.mrb[0].mxu0
      %v1268 = vadd.f32 0.0, %v1267
      %v1269 = vpop.f32.mrb[0].mxu0
      %1270 = vmatprep.mubr.bf16.mxu0 0
      %1271 = vmatmul.mubr.bf16.gmra.mrb[0].mxu0 %v1191
      %v1272 = vpop.f32.mrb[0].mxu0
      %v1273 = vadd.f32 0.0, %v1272
      %v1274 = vpop.f32.mrb[0].mxu0
      %v1275 = vpop.f32.mrb[0].mxu0
      %v1276 = vadd.f32 0.0, %v1275
      %v1277 = vpop.f32.mrb[0].mxu0
      %1278 = vmatprep.mubr.bf16.mxu0 0
      %1279 = vmatmul.mubr.bf16.gmra.mrb[0].mxu0 %v1192
      %v1280 = vpop.f32.mrb[0].mxu0
      %v1281 = vadd.f32 0.0, %v1280
      %v1282 = vpop.f32.mrb[0].mxu0
      %v1283 = vpop.f32.mrb[0].mxu0
      %v1284 = vadd.f32 0.0, %v1283
      %v1285 = vpop.f32.mrb[0].mxu0
      %1286 = vmatprep.mubr.bf16.mxu0 0
      %1287 = vmatmul.mubr.bf16.gmra.mrb[0].mxu0 %v1193
      %v1288 = vpop.f32.mrb[0].mxu0
      %v1289 = vadd.f32 0.0, %v1288
      %v1290 = vpop.f32.mrb[0].mxu0
      %v1291 = vpop.f32.mrb[0].mxu0
      %v1292 = vadd.f32 0.0, %v1291
      %v1293 = vpop.f32.mrb[0].mxu0
      %1294 = vmatprep.mubr.bf16.mxu0 0
      %1295 = vmatmul.mubr.bf16.gmra.mrb[0].mxu0 %v1194
      %v1296 = vpop.f32.mrb[0].mxu0
      %v1297 = vadd.f32 0.0, %v1296
      %v1298 = vpop.f32.mrb[0].mxu0
      %v1299 = vpop.f32.mrb[0].mxu0
      %v1300 = vadd.f32 0.0, %v1299
      %v1301 = vpop.f32.mrb[0].mxu0
      %1302 = vmatprep.mubr.bf16.mxu0 0
      %1303 = vmatmul.mubr.bf16.gmra.mrb[0].mxu0 %v1195
      %v1304 = vpop.f32.mrb[0].mxu0
      %v1305 = vadd.f32 0.0, %v1304
      %v1306 = vpop.f32.mrb[0].mxu0
      %v1307 = vpop.f32.mrb[0].mxu0
      %v1308 = vadd.f32 0.0, %v1307
      %v1309 = vpop.f32.mrb[0].mxu0
      %1310 = vmatprep.mubr.bf16.mxu0 0
      %1311 = vmatmul.mubr.bf16.gmra.mrb[0].mxu0 %v1196
      %v1312 = vpop.f32.mrb[0].mxu0
      %v1313 = vadd.f32 0.0, %v1312
      %v1314 = vpop.f32.mrb[0].mxu0
      %v1315 = vpop.f32.mrb[0].mxu0
      %v1316 = vadd.f32 0.0, %v1315
      %v1317 = vpop.f32.mrb[0].mxu0
      %1318 = vmatprep.mubr.bf16.mxu0 0
      %1319 = vmatmul.mubr.bf16.gmra.mrb[0].mxu0 %v1197
      %v1320 = vpop.f32.mrb[0].mxu0
      %v1321 = vadd.f32 0.0, %v1320
      %v1322 = vpop.f32.mrb[0].mxu0
      %v1323 = vpop.f32.mrb[0].mxu0
      %v1324 = vadd.f32 0.0, %v1323
      %v1325 = vpop.f32.mrb[0].mxu0
      %1326 = vmatprep.mubr.bf16.mxu0 0
      %1327 = vmatmul.mubr.bf16.gmra.mrb[0].mxu0 %v1198
      %v1328 = vpop.f32.mrb[0].mxu0
      %v1329 = vadd.f32 0.0, %v1328
      %v1330 = vpop.f32.mrb[0].mxu0
      %v1331 = vpop.f32.mrb[0].mxu0
      %v1332 = vadd.f32 0.0, %v1331
      %v1333 = vpop.f32.mrb[0].mxu0
      %1334 = vmatprep.mubr.bf16.mxu0 0
      %1335 = vmatmul.mubr.bf16.gmra.mrb[0].mxu0 %v1199
      %v1336 = vpop.f32.mrb[0].mxu0
      %v1337 = vadd.f32 0.0, %v1336
      %v1338 = vpop.f32.mrb[0].mxu0
      %v1339 = vpop.f32.mrb[0].mxu0
      %v1340 = vadd.f32 0.0, %v1339
      %v1341 = vpop.f32.mrb[0].mxu0
      %1342 = vmatprep.mubr.bf16.mxu0 0
      %1343 = vmatmul.mubr.bf16.gmra.mrb[0].mxu0 %v1200
      %v1344 = vpop.f32.mrb[0].mxu0
      %v1345 = vadd.f32 0.0, %v1344
      %v1346 = vpop.f32.mrb[0].mxu0
      %v1347 = vpop.f32.mrb[0].mxu0
      %v1348 = vpop.f32.mrb[0].mxu0
      %1349 = vdwg.mxu0
      %v1350 = vmax.f32 %v1012, %v1249
      %v1351 = vmax.f32 %v1015, %v1252
      %v1352 = vmax.f32 %v1020, %v1257
      %v1353 = vmax.f32 %v1023, %v1260
      %v1354 = vmax.f32 %v1028, %v1265
      %v1355 = vmax.f32 %v1031, %v1268
      %v1356 = vmax.f32 %v1036, %v1273
      %v1357 = vmax.f32 %v1039, %v1276
      %v1358 = vmax.f32 %v1044, %v1281
      %v1359 = vmax.f32 %v1047, %v1284
      %v1360 = vmax.f32 %v1052, %v1289
      %v1361 = vmax.f32 %v1055, %v1292
      %v1362 = vmax.f32 %v1060, %v1297
      %v1363 = vmax.f32 %v1063, %v1300
      %v1364 = vmax.f32 %v1068, %v1305
      %v1365 = vmax.f32 %v1071, %v1308
      %v1366 = vmax.f32 %v1076, %v1313
      %v1367 = vmax.f32 %v1079, %v1316
      %v1368 = vmax.f32 %v1084, %v1321
      %v1369 = vmax.f32 %v1087, %v1324
      %v1370 = vmax.f32 %v1092, %v1329
      %v1371 = vmax.f32 %v1095, %v1332
      %v1372 = vmax.f32 %v1100, %v1337
      %v1373 = vmax.f32 %v1103, %v1340
      %v1374 = vmax.f32 %v1108, %v1345
      %v1375 = vmax.f32 %v851, %v1350
      %v1376 = vmax.f32 %v852, %v1351
      %v1377 = vmax.f32 %v853, %v1352
      %v1378 = vmax.f32 %v854, %v1353
      %v1379 = vmax.f32 %v855, %v1354
      %v1380 = vmax.f32 %v856, %v1355
      %v1381 = vmax.f32 %v857, %v1356
      %v1382 = vmax.f32 %v858, %v1357
      %v1383 = vmax.f32 %v859, %v1358
      %v1384 = vmax.f32 %v860, %v1359
      %v1385 = vmax.f32 %v861, %v1360
      %v1386 = vmax.f32 %v862, %v1361
      %v1387 = vmax.f32 %v863, %v1362
      %v1388 = vmax.f32 %v864, %v1363
      %v1389 = vmax.f32 %v865, %v1364
      %v1390 = vmax.f32 %v866, %v1365
      %v1391 = vmax.f32 %v867, %v1366
      %v1392 = vmax.f32 %v868, %v1367
      %v1393 = vmax.f32 %v869, %v1368
      %v1394 = vmax.f32 %v870, %v1369
      %v1395 = vmax.f32 %v871, %v1370
      %v1396 = vmax.f32 %v872, %v1371
      %v1397 = vmax.f32 %v873, %v1372
      %v1398 = vmax.f32 %v874, %v1373
      %v1399 = vmax.f32 %v875, %v1374
      %v1400 = vld [vmem:[%s5] sm:$0x1]
      %v1402 = vlaneseq
      %v1403 = vshrl.u32 %v1402, 7
      %v1404 = vsub.s32 0, %v1403
      %v1405 = vrot.slane %v1400, %v1404
      %v1407 = vadd.f32 %v1375, %v1405
      %v1408 = vadd.f32 %v1376, %v1405
      %v1409 = vadd.f32 %v1377, %v1405
      %v1410 = vadd.f32 %v1378, %v1405
      %v1411 = vadd.f32 %v1379, %v1405
      %v1412 = vadd.f32 %v1380, %v1405
      %v1413 = vadd.f32 %v1381, %v1405
      %v1414 = vadd.f32 %v1382, %v1405
      %v1415 = vadd.f32 %v1383, %v1405
      %v1416 = vadd.f32 %v1384, %v1405
      %v1417 = vadd.f32 %v1385, %v1405
      %v1418 = vadd.f32 %v1386, %v1405
      %v1419 = vadd.f32 %v1387, %v1405
      %v1420 = vadd.f32 %v1388, %v1405
      %v1421 = vadd.f32 %v1389, %v1405
      %v1422 = vadd.f32 %v1390, %v1405
      %v1423 = vadd.f32 %v1391, %v1405
      %v1424 = vadd.f32 %v1392, %v1405
      %v1425 = vadd.f32 %v1393, %v1405
      %v1426 = vadd.f32 %v1394, %v1405
      %v1427 = vadd.f32 %v1395, %v1405
      %v1428 = vadd.f32 %v1396, %v1405
      %v1429 = vadd.f32 %v1397, %v1405
      %v1430 = vadd.f32 %v1398, %v1405
      %v1431 = vadd.f32 %v1399, %v1405
      %v1432 = vmax.f32 %v1407, 0.0
      %v1433 = vmax.f32 %v1408, 0.0
      %v1434 = vmax.f32 %v1409, 0.0
      %v1435 = vmax.f32 %v1410, 0.0
      %v1436 = vmax.f32 %v1411, 0.0
      %v1437 = vmax.f32 %v1412, 0.0
      %v1438 = vmax.f32 %v1413, 0.0
      %v1439 = vmax.f32 %v1414, 0.0
      %v1440 = vmax.f32 %v1415, 0.0
      %v1441 = vmax.f32 %v1416, 0.0
      %v1442 = vmax.f32 %v1417, 0.0
      %v1443 = vmax.f32 %v1418, 0.0
      %v1444 = vmax.f32 %v1419, 0.0
      %v1445 = vmax.f32 %v1420, 0.0
      %v1446 = vmax.f32 %v1421, 0.0
      %v1447 = vmax.f32 %v1422, 0.0
      %v1448 = vmax.f32 %v1423, 0.0
      %v1449 = vmax.f32 %v1424, 0.0
      %v1450 = vmax.f32 %v1425, 0.0
      %v1451 = vmax.f32 %v1426, 0.0
      %v1452 = vmax.f32 %v1427, 0.0
      %v1453 = vmax.f32 %v1428, 0.0
      %v1454 = vmax.f32 %v1429, 0.0
      %v1455 = vmax.f32 %v1430, 0.0
      %v1456 = vmax.f32 %v1431, 0.0
      %v1457 = vpack.c.bf16 %v1433, %v1432
      %v1458 = vpack.c.bf16 %v1435, %v1434
      %v1459 = vpack.c.bf16 %v1437, %v1436
      %v1460 = vpack.c.bf16 %v1439, %v1438
      %v1461 = vpack.c.bf16 %v1441, %v1440
      %v1462 = vpack.c.bf16 %v1443, %v1442
      %v1463 = vpack.c.bf16 %v1445, %v1444
      %v1464 = vpack.c.bf16 %v1447, %v1446
      %v1465 = vpack.c.bf16 %v1449, %v1448
      %v1466 = vpack.c.bf16 %v1451, %v1450
      %v1467 = vpack.c.bf16 %v1453, %v1452
      %v1468 = vpack.c.bf16 %v1455, %v1454
      %v1469 = vpack.c.bf16 %v1456, %v1456
      %v1483 = vunpack.c.l.b16 %v1457
      %v1484 = vunpack.c.h.b16 %v1457
      %v1485 = vunpack.c.l.b16 %v1458
      %v1486 = vunpack.c.h.b16 %v1458
      %v1487 = vunpack.c.l.b16 %v1459
      %v1488 = vunpack.c.h.b16 %v1459
      %v1489 = vunpack.c.l.b16 %v1460
      %v1490 = vunpack.c.h.b16 %v1460
      %v1491 = vunpack.c.l.b16 %v1461
      %v1492 = vunpack.c.h.b16 %v1461
      %v1493 = vunpack.c.l.b16 %v1462
      %v1494 = vunpack.c.h.b16 %v1462
      %v1495 = vunpack.c.l.b16 %v1463
      %v1496 = vunpack.c.h.b16 %v1463
      %v1497 = vunpack.c.l.b16 %v1464
      %v1498 = vunpack.c.h.b16 %v1464
      %v1499 = vunpack.c.l.b16 %v1465
      %v1500 = vunpack.c.h.b16 %v1465
      %v1501 = vunpack.c.l.b16 %v1466
      %v1502 = vunpack.c.h.b16 %v1466
      %v1503 = vunpack.c.l.b16 %v1467
      %v1504 = vunpack.c.h.b16 %v1467
      %v1505 = vunpack.c.l.b16 %v1468
      %v1506 = vunpack.c.h.b16 %v1468
      %v1507 = vunpack.c.l.b16 %v1469
      %v1508 = vpack.c.b16 %v1483, %v1483
      %v1509 = vpack.c.b16 %v1484, %v1484
      %v1510 = vpack.c.b16 %v1485, %v1485
      %v1511 = vpack.c.b16 %v1486, %v1486
      %v1512 = vpack.c.b16 %v1487, %v1487
      %v1513 = vpack.c.b16 %v1488, %v1488
      %v1514 = vpack.c.b16 %v1489, %v1489
      %v1515 = vpack.c.b16 %v1490, %v1490
      %v1516 = vpack.c.b16 %v1491, %v1491
      %v1517 = vpack.c.b16 %v1492, %v1492
      %v1518 = vpack.c.b16 %v1493, %v1493
      %v1519 = vpack.c.b16 %v1494, %v1494
      %v1520 = vpack.c.b16 %v1495, %v1495
      %v1521 = vpack.c.b16 %v1496, %v1496
      %v1522 = vpack.c.b16 %v1497, %v1497
      %v1523 = vpack.c.b16 %v1498, %v1498
      %v1524 = vpack.c.b16 %v1499, %v1499
      %v1525 = vpack.c.b16 %v1500, %v1500
      %v1526 = vpack.c.b16 %v1501, %v1501
      %v1527 = vpack.c.b16 %v1502, %v1502
      %v1528 = vpack.c.b16 %v1503, %v1503
      %v1529 = vpack.c.b16 %v1504, %v1504
      %v1530 = vpack.c.b16 %v1505, %v1505
      %v1531 = vpack.c.b16 %v1506, %v1506
      %v1532 = vpack.c.b16 %v1507, %v1507
      %1558 = vst [vmem:[%s311] sm:$0xf] %v1508
      %1559 = vst [vmem:[%s311 + $0x4] sm:$0xf] %v1509
      %1560 = vst [vmem:[%s311 + $0x8] sm:$0xf] %v1510
      %1561 = vst [vmem:[%s311 + $0xc] sm:$0xf] %v1511
      %1562 = vst [vmem:[%s311 + $0x10] sm:$0xf] %v1512
      %1563 = vst [vmem:[%s311 + $0x14] sm:$0xf] %v1513
      %1564 = vst [vmem:[%s311 + $0x18] sm:$0xf] %v1514
      %1565 = vst [vmem:[%s311 + $0x1c] sm:$0xf] %v1515
      %1566 = vst [vmem:[%s311 + $0x20] sm:$0xf] %v1516
      %1567 = vst [vmem:[%s311 + $0x24] sm:$0xf] %v1517
      %1568 = vst [vmem:[%s311 + $0x28] sm:$0xf] %v1518
      %1569 = vst [vmem:[%s311 + $0x2c] sm:$0xf] %v1519
      %1570 = vst [vmem:[%s311 + $0x30] sm:$0xf] %v1520
      %1571 = vst [vmem:[%s311 + $0x34] sm:$0xf] %v1521
      %1572 = vst [vmem:[%s311 + $0x38] sm:$0xf] %v1522
      %1573 = vst [vmem:[%s311 + $0x3c] sm:$0xf] %v1523
      %1574 = vst [vmem:[%s311 + $0x40] sm:$0xf] %v1524
      %1575 = vst [vmem:[%s311 + $0x44] sm:$0xf] %v1525
      %1576 = vst [vmem:[%s311 + $0x48] sm:$0xf] %v1526
      %1577 = vst [vmem:[%s311 + $0x4c] sm:$0xf] %v1527
      %1578 = vst [vmem:[%s311 + $0x50] sm:$0xf] %v1528
      %1579 = vst [vmem:[%s311 + $0x54] sm:$0xf] %v1529
      %1580 = vst [vmem:[%s311 + $0x58] sm:$0xf] %v1530
      %1581 = vst [vmem:[%s311 + $0x5c] sm:$0xf] %v1531
      %1582 = vst [vmem:[%s311 + $0x60] sm:$0x3] %v1532
      %p1583 = scmp.lt.s32.totalorder %s17, 1
      %s1584 = scalar_select %p1583, %s17, 1
      %s1585 = smul.addr %s1584, 25
      %s1586 = smul.addr %s1585, 4
      %s1587 = scalar_lea.vmem %s6, %s1586
      // Predicated region
      $region45: #{forward.3} parent=43 // pred_check
        %p1588 = pneg %p181
      $region46: #{forward.3} parent=43 // pred_check_branch
        %1590 = sbr.rel (%p1588) target = $region48
      $region47: #{forward.3} parent=43 // pred_region
        _
      $region48: #{forward.3} parent=43 // pred_fallthru
        _
    $region44: #{forward.3} parent=5 // pred_fallthru
      _
    %p1591 = scmp.le.s32.totalorder 2, %s12
    // Predicated region
    $region49: #{forward.3} parent=5 // pred_check
      %p1592 = pneg %p1591
    $region50: #{forward.3} parent=5 // pred_check_branch
      %1594 = sbr.rel (%p1592) target = $region52
    $region51: #{forward.3} parent=5 // pred_region
      %s1595 = ssub.s32 %s12, 2
      // Predicated region
      $region53: #{forward.3} parent=51 // pred_check
        %p1596 = pneg %p187
      $region54: #{forward.3} parent=51 // pred_check_branch
        %1598 = sbr.rel (%p1596) target = $region56
      $region55: #{forward.3} parent=51 // pred_region
        %p1599 = scmp.lt.s32.totalorder %s18, 1
        %s1600 = scalar_select %p1599, %s18, 1
        %s1601 = smul.addr %s1600, 25
        %s1602 = smul.addr %s1601, 4
        %s1603 = scalar_lea.vmem %s6, %s1602
      $region56: #{forward.3} parent=51 // pred_fallthru
        _
    $region52: #{forward.3} parent=5 // pred_fallthru
      _
  $region6: #{forward.3} parent=0 // loop_footer
    %s16 = sadd.s32 1, %s12
  $region7: #{forward.3} parent=0 // loop_footer_branch
    %11 = sbr.rel target = $region3
  $region8: #{forward.3} parent=0 // loop_exit
    _

// kernel: forward.4
$region0: #{forward.4}
  #allocation0 [shape = 'u32[]', space=smem, size = 0x4, offset = 0x4, fixed_abs, tag = 'smem constant byte address 0x4 - core index']
  #allocation1 [shape = 'u32[144,128]{1,0:T(1,128)}', space=vmem, size = 0x12000, scoped, tag = 'internal scratch']
  %s0 = inlined_call_operand.vmem [shape: bf16[2,25,256], index: 0, kind: input, shape index: {}]
  %s1 = inlined_call_operand.vmem [shape: bf16[2,25,256], index: 1, kind: input, shape index: {}]
  %s2 = inlined_call_operand.vmem [shape: bf16[2,25,256], index: 2, kind: input, shape index: {}]
  %s3 = inlined_call_operand.vmem [shape: bf16[2,25,256], index: 3, kind: input, shape index: {}]
  %s4 = inlined_call_operand.vmem [shape: bf16[256,128], index: 4, kind: input, shape index: {}]
  %s5 = inlined_call_operand.vmem [shape: f32[1,128], index: 5, kind: input, shape index: {}]
  %s6 = inlined_call_operand.vmem [shape: bf16[2,25,128], index: 6, kind: output, shape index: {}]
  %s7 = sld [smem:[#allocation0]]
  $region57: #{forward.4} parent=0
    _
  %s9 = ssub.s32 1, %s7
  %s10 = scalar_select 0, %s9, %s7
  loop: start=0, step=1, limit=4
  $region2: #{forward.4} parent=0 // loop_pre_header
    _
  $region3: #{forward.4} parent=0 // loop_header
    %s12 = sphi 0, %s16
    %p13 = scmp.ge.s32.totalorder %s12, 4
    %s22 = sphi 0, %s24
    %s25 = sphi 0, %s22
    %s26 = sphi 0, %s25
    %s42 = sphi 0, %s26
    %s48 = sphi 0, %s50
    %s51 = sphi 0, %s48
    %s52 = sphi 0, %s51
    %s68 = sphi 0, %s52
    %s74 = sphi 0, %s76
    %s77 = sphi 0, %s74
    %s78 = sphi 0, %s77
    %s94 = sphi 0, %s78
    %s100 = sphi 0, %s102
    %s103 = sphi 0, %s100
    %s104 = sphi 0, %s103
    %s120 = sphi 0, %s104
    %s124 = sphi 0, %s124
    %s126 = sphi 0, %s124
    %s127 = sphi 0, %s126
    %s141 = sphi 0, %s127
    %s145 = sphi 0, %s145
    %s147 = sphi 0, %s145
    %s148 = sphi 0, %s147
    %s162 = sphi 0, %s148
    %s168 = sphi 0, %s170
    %s171 = sphi 0, %s168
    %s172 = sphi 0, %s171
    %s188 = sphi 0, %s172
  $region4: #{forward.4} parent=0 // loop_header_branch
    %15 = sbr.rel (%p13) target = $region8
  $region5: #{forward.4} parent=0 // loop_body
    %s17 = ssub.s32 %s12, 1
    %s18 = ssub.s32 %s12, 2
    %s19 = sadd.s32 %s12, 1
    %s20 = ssub.s32 %s12, %s19
    %p21 = scmp.eq.s32.totalorder %s20, 0
    %s23 = sadd.s32 %s22, 1
    %s24 = scalar_select %p21, %s22, %s23
    %p27 = pneg %p21
    %p28 = scmp.eq.s32.totalorder %s12, 1
    %p29 = por %p27, %p28
    %p30 = scmp.ne.s32.totalorder %s22, %s25
    %p31 = scmp.eq.s32.totalorder %s12, 0
    %p32 = por %p30, %p31
    %p33 = scmp.ne.s32.totalorder %s22, %s25
    %p34 = scmp.eq.s32.totalorder %s17, 1
    %p35 = por %p33, %p34
    %p36 = scmp.ne.s32.totalorder %s25, %s26
    %p37 = scmp.eq.s32.totalorder %s17, 0
    %p38 = por %p36, %p37
    %p39 = scmp.ne.s32.totalorder %s25, %s26
    %p40 = scmp.eq.s32.totalorder %s18, 1
    %p41 = por %p39, %p40
    %p43 = scmp.ne.s32.totalorder %s26, %s42
    %p44 = scmp.eq.s32.totalorder %s18, 0
    %p45 = por %p43, %p44
    %s46 = ssub.s32 %s12, %s19
    %p47 = scmp.eq.s32.totalorder %s46, 0
    %s49 = sadd.s32 %s48, 1
    %s50 = scalar_select %p47, %s48, %s49
    %p53 = pneg %p47
    %p54 = scmp.eq.s32.totalorder %s12, 1
    %p55 = por %p53, %p54
    %p56 = scmp.ne.s32.totalorder %s48, %s51
    %p57 = scmp.eq.s32.totalorder %s12, 0
    %p58 = por %p56, %p57
    %p59 = scmp.ne.s32.totalorder %s48, %s51
    %p60 = scmp.eq.s32.totalorder %s17, 1
    %p61 = por %p59, %p60
    %p62 = scmp.ne.s32.totalorder %s51, %s52
    %p63 = scmp.eq.s32.totalorder %s17, 0
    %p64 = por %p62, %p63
    %p65 = scmp.ne.s32.totalorder %s51, %s52
    %p66 = scmp.eq.s32.totalorder %s18, 1
    %p67 = por %p65, %p66
    %p69 = scmp.ne.s32.totalorder %s52, %s68
    %p70 = scmp.eq.s32.totalorder %s18, 0
    %p71 = por %p69, %p70
    %s72 = ssub.s32 %s12, %s19
    %p73 = scmp.eq.s32.totalorder %s72, 0
    %s75 = sadd.s32 %s74, 1
    %s76 = scalar_select %p73, %s74, %s75
    %p79 = pneg %p73
    %p80 = scmp.eq.s32.totalorder %s12, 1
    %p81 = por %p79, %p80
    %p82 = scmp.ne.s32.totalorder %s74, %s77
    %p83 = scmp.eq.s32.totalorder %s12, 0
    %p84 = por %p82, %p83
    %p85 = scmp.ne.s32.totalorder %s74, %s77
    %p86 = scmp.eq.s32.totalorder %s17, 1
    %p87 = por %p85, %p86
    %p88 = scmp.ne.s32.totalorder %s77, %s78
    %p89 = scmp.eq.s32.totalorder %s17, 0
    %p90 = por %p88, %p89
    %p91 = scmp.ne.s32.totalorder %s77, %s78
    %p92 = scmp.eq.s32.totalorder %s18, 1
    %p93 = por %p91, %p92
    %p95 = scmp.ne.s32.totalorder %s78, %s94
    %p96 = scmp.eq.s32.totalorder %s18, 0
    %p97 = por %p95, %p96
    %s98 = ssub.s32 %s12, %s19
    %p99 = scmp.eq.s32.totalorder %s98, 0
    %s101 = sadd.s32 %s100, 1
    %s102 = scalar_select %p99, %s100, %s101
    %p105 = pneg %p99
    %p106 = scmp.eq.s32.totalorder %s12, 1
    %p107 = por %p105, %p106
    %p108 = scmp.ne.s32.totalorder %s100, %s103
    %p109 = scmp.eq.s32.totalorder %s12, 0
    %p110 = por %p108, %p109
    %p111 = scmp.ne.s32.totalorder %s100, %s103
    %p112 = scmp.eq.s32.totalorder %s17, 1
    %p113 = por %p111, %p112
    %p114 = scmp.ne.s32.totalorder %s103, %s104
    %p115 = scmp.eq.s32.totalorder %s17, 0
    %p116 = por %p114, %p115
    %p117 = scmp.ne.s32.totalorder %s103, %s104
    %p118 = scmp.eq.s32.totalorder %s18, 1
    %p119 = por %p117, %p118
    %p121 = scmp.ne.s32.totalorder %s104, %s120
    %p122 = scmp.eq.s32.totalorder %s18, 0
    %p123 = por %p121, %p122
    %s125 = sadd.s32 %s124, 1
    %p128 = scmp.eq.s32.totalorder %s12, 1
    %p129 = scmp.ne.s32.totalorder %s124, %s126
    %p130 = scmp.eq.s32.totalorder %s12, 0
    %p131 = por %p129, %p130
    %p132 = scmp.ne.s32.totalorder %s124, %s126
    %p133 = scmp.eq.s32.totalorder %s17, 1
    %p134 = por %p132, %p133
    %p135 = scmp.ne.s32.totalorder %s126, %s127
    %p136 = scmp.eq.s32.totalorder %s17, 0
    %p137 = por %p135, %p136
    %p138 = scmp.ne.s32.totalorder %s126, %s127
    %p139 = scmp.eq.s32.totalorder %s18, 1
    %p140 = por %p138, %p139
    %p142 = scmp.ne.s32.totalorder %s127, %s141
    %p143 = scmp.eq.s32.totalorder %s18, 0
    %p144 = por %p142, %p143
    %s146 = sadd.s32 %s145, 1
    %p149 = scmp.eq.s32.totalorder %s12, 1
    %p150 = scmp.ne.s32.totalorder %s145, %s147
    %p151 = scmp.eq.s32.totalorder %s12, 0
    %p152 = por %p150, %p151
    %p153 = scmp.ne.s32.totalorder %s145, %s147
    %p154 = scmp.eq.s32.totalorder %s17, 1
    %p155 = por %p153, %p154
    %p156 = scmp.ne.s32.totalorder %s147, %s148
    %p157 = scmp.eq.s32.totalorder %s17, 0
    %p158 = por %p156, %p157
    %p159 = scmp.ne.s32.totalorder %s147, %s148
    %p160 = scmp.eq.s32.totalorder %s18, 1
    %p161 = por %p159, %p160
    %p163 = scmp.ne.s32.totalorder %s148, %s162
    %p164 = scmp.eq.s32.totalorder %s18, 0
    %p165 = por %p163, %p164
    %s166 = ssub.s32 %s12, %s19
    %p167 = scmp.eq.s32.totalorder %s166, 0
    %s169 = sadd.s32 %s168, 1
    %s170 = scalar_select %p167, %s168, %s169
    %p173 = pneg %p167
    %p174 = scmp.eq.s32.totalorder %s12, 1
    %p175 = por %p173, %p174
    %p176 = scmp.ne.s32.totalorder %s168, %s171
    %p177 = scmp.eq.s32.totalorder %s12, 0
    %p178 = por %p176, %p177
    %p179 = scmp.ne.s32.totalorder %s168, %s171
    %p180 = scmp.eq.s32.totalorder %s17, 1
    %p181 = por %p179, %p180
    %p182 = scmp.ne.s32.totalorder %s171, %s172
    %p183 = scmp.eq.s32.totalorder %s17, 0
    %p184 = por %p182, %p183
    %p185 = scmp.ne.s32.totalorder %s171, %s172
    %p186 = scmp.eq.s32.totalorder %s18, 1
    %p187 = por %p185, %p186
    %p189 = scmp.ne.s32.totalorder %s172, %s188
    %p190 = scmp.eq.s32.totalorder %s18, 0
    %p191 = por %p189, %p190
    %p192 = scmp.le.s32.totalorder 1, %s12
    %p193 = scmp.lt.s32.totalorder %s12, 3
    %p194 = pnand %p192, %p193
    %p195 = pneg %p194
    // Predicated region
    $region9: #{forward.4} parent=5 // pred_check
      _
    $region10: #{forward.4} parent=5 // pred_check_branch
      %197 = sbr.rel (%p194) target = $region12
    $region11: #{forward.4} parent=5 // pred_region
      %s198 = ssub.s32 %s12, 1
      // Predicated region
      $region13: #{forward.4} parent=11 // pred_check
        %p199 = pneg %p137
      $region14: #{forward.4} parent=11 // pred_check_branch
        %201 = sbr.rel (%p199) target = $region16
      $region15: #{forward.4} parent=11 // pred_region
        _
      $region16: #{forward.4} parent=11 // pred_fallthru
        _
      // Predicated region
      $region17: #{forward.4} parent=11 // pred_check
        %p202 = pneg %p158
      $region18: #{forward.4} parent=11 // pred_check_branch
        %204 = sbr.rel (%p202) target = $region20
      $region19: #{forward.4} parent=11 // pred_region
        _
      $region20: #{forward.4} parent=11 // pred_fallthru
        _
    $region12: #{forward.4} parent=5 // pred_fallthru
      _
    %p205 = scmp.lt.s32.totalorder %s12, 2
    // Predicated region
    $region21: #{forward.4} parent=5 // pred_check
      %p206 = pneg %p205
    $region22: #{forward.4} parent=5 // pred_check_branch
      %208 = sbr.rel (%p206) target = $region24
    $region23: #{forward.4} parent=5 // pred_region
      // Predicated region
      $region25: #{forward.4} parent=23 // pred_check
        %p209 = pneg %p32
      $region26: #{forward.4} parent=23 // pred_check_branch
        %211 = sbr.rel (%p209) target = $region28
      $region27: #{forward.4} parent=23 // pred_region
        %p212 = scmp.lt.s32.totalorder %s12, 1
        %s213 = scalar_select %p212, %s12, 1
        %s214 = smul.addr %s213, 8
        %s215 = smul.addr %s214, 4
        %s216 = scalar_lea.vmem %s0, %s215
      $region28: #{forward.4} parent=23 // pred_fallthru
        _
      // Predicated region
      $region29: #{forward.4} parent=23 // pred_check
        %p217 = pneg %p58
      $region30: #{forward.4} parent=23 // pred_check_branch
        %219 = sbr.rel (%p217) target = $region32
      $region31: #{forward.4} parent=23 // pred_region
        %p220 = scmp.lt.s32.totalorder %s12, 1
        %s221 = scalar_select %p220, %s12, 1
        %s222 = smul.addr %s221, 8
        %s223 = smul.addr %s222, 4
        %s224 = scalar_lea.vmem %s1, %s223
      $region32: #{forward.4} parent=23 // pred_fallthru
        _
      // Predicated region
      $region33: #{forward.4} parent=23 // pred_check
        %p225 = pneg %p84
      $region34: #{forward.4} parent=23 // pred_check_branch
        %227 = sbr.rel (%p225) target = $region36
      $region35: #{forward.4} parent=23 // pred_region
        %p228 = scmp.lt.s32.totalorder %s12, 1
        %s229 = scalar_select %p228, %s12, 1
        %s230 = smul.addr %s229, 8
        %s231 = smul.addr %s230, 4
        %s232 = scalar_lea.vmem %s2, %s231
      $region36: #{forward.4} parent=23 // pred_fallthru
        _
      // Predicated region
      $region37: #{forward.4} parent=23 // pred_check
        %p233 = pneg %p110
      $region38: #{forward.4} parent=23 // pred_check_branch
        %235 = sbr.rel (%p233) target = $region40
      $region39: #{forward.4} parent=23 // pred_region
        %p236 = scmp.lt.s32.totalorder %s12, 1
        %s237 = scalar_select %p236, %s12, 1
        %s238 = smul.addr %s237, 8
        %s239 = smul.addr %s238, 4
        %s240 = scalar_lea.vmem %s3, %s239
      $region40: #{forward.4} parent=23 // pred_fallthru
        _
    $region24: #{forward.4} parent=5 // pred_fallthru
      _
    %p241 = scmp.le.s32.totalorder 1, %s12
    %p242 = scmp.lt.s32.totalorder %s12, 3
    %p243 = pnand %p241, %p242
    %p244 = pneg %p243
    // Predicated region
    $region41: #{forward.4} parent=5 // pred_check
      _
    $region42: #{forward.4} parent=5 // pred_check_branch
      %246 = sbr.rel (%p243) target = $region44
    $region43: #{forward.4} parent=5 // pred_region
      %s247 = ssub.s32 %s12, 1
      %p248 = scmp.lt.s32.totalorder %s17, 1
      %s249 = scalar_select %p248, %s17, 1
      %s250 = smul.addr %s249, 8
      %s251 = smul.addr %s250, 4
      %s252 = scalar_lea.vmem %s0, %s251
      %p253 = pneg %p38
      %p254 = pneg %p35
      %p255 = scmp.lt.s32.totalorder %s17, 1
      %s256 = scalar_select %p255, %s17, 1
      %s257 = smul.addr %s256, 8
      %s258 = smul.addr %s257, 4
      %s259 = scalar_lea.vmem %s1, %s258
      %p260 = pneg %p64
      %p261 = pneg %p61
      %p262 = scmp.lt.s32.totalorder %s17, 1
      %s263 = scalar_select %p262, %s17, 1
      %s264 = smul.addr %s263, 8
      %s265 = smul.addr %s264, 4
      %s266 = scalar_lea.vmem %s2, %s265
      %p267 = pneg %p90
      %p268 = pneg %p87
      %p269 = scmp.lt.s32.totalorder %s17, 1
      %s270 = scalar_select %p269, %s17, 1
      %s271 = smul.addr %s270, 8
      %s272 = smul.addr %s271, 4
      %s273 = scalar_lea.vmem %s3, %s272
      %p274 = pneg %p116
      %p275 = pneg %p113
      %p276 = pneg %p137
      %p277 = pneg %p134
      %p278 = pneg %p158
      %p279 = pneg %p155
      %p280 = pneg %p184
      %p281 = pneg %p181
      %p282 = scmp.lt.s32.totalorder %s17, 1
      %s283 = scalar_select %p282, %s17, 1
      %s284 = smul.addr %s283, 4
      %s285 = smul.addr %s284, 4
      %s286 = scalar_lea.vmem %s6, %s285
      %p287 = scmp.lt.s32.totalorder %s17, 1
      %s288 = scalar_select %p287, %s17, 1
      %s289 = smul.addr %s288, 8
      %s290 = smul.addr %s289, 4
      %s291 = scalar_lea.vmem %s0, %s290
      %p292 = scmp.lt.s32.totalorder %s17, 1
      %s293 = scalar_select %p292, %s17, 1
      %s294 = smul.addr %s293, 8
      %s295 = smul.addr %s294, 4
      %s296 = scalar_lea.vmem %s1, %s295
      %p297 = scmp.lt.s32.totalorder %s17, 1
      %s298 = scalar_select %p297, %s17, 1
      %s299 = smul.addr %s298, 8
      %s300 = smul.addr %s299, 4
      %s301 = scalar_lea.vmem %s2, %s300
      %p302 = scmp.lt.s32.totalorder %s17, 1
      %s303 = scalar_select %p302, %s17, 1
      %s304 = smul.addr %s303, 8
      %s305 = smul.addr %s304, 4
      %s306 = scalar_lea.vmem %s3, %s305
      %p307 = scmp.lt.s32.totalorder %s17, 1
      %s308 = scalar_select %p307, %s17, 1
      %s309 = smul.addr %s308, 4
      %s310 = smul.addr %s309, 4
      %s311 = scalar_lea.vmem %s6, %s310
      %v313 = vld [vmem:[%s4] sm:$0xf]
      %v314 = vld [vmem:[%s4 + $0x4] sm:$0xf]
      %v315 = vld [vmem:[%s4 + $0x8] sm:$0xf]
      %v316 = vld [vmem:[%s4 + $0xc] sm:$0xf]
      %v317 = vld [vmem:[%s4 + $0x10] sm:$0xf]
      %v318 = vld [vmem:[%s4 + $0x14] sm:$0xf]
      %v319 = vld [vmem:[%s4 + $0x18] sm:$0xf]
      %v320 = vld [vmem:[%s4 + $0x1c] sm:$0xf]
      %v321 = vld [vmem:[%s4 + $0x20] sm:$0xf]
      %v322 = vld [vmem:[%s4 + $0x24] sm:$0xf]
      %v323 = vld [vmem:[%s4 + $0x28] sm:$0xf]
      %v324 = vld [vmem:[%s4 + $0x2c] sm:$0xf]
      %v325 = vld [vmem:[%s4 + $0x30] sm:$0xf]
      %v326 = vld [vmem:[%s4 + $0x34] sm:$0xf]
      %v327 = vld [vmem:[%s4 + $0x38] sm:$0xf]
      %v328 = vld [vmem:[%s4 + $0x3c] sm:$0xf]
      %v329 = vld [vmem:[%s4 + $0x40] sm:$0xf]
      %v330 = vld [vmem:[%s4 + $0x44] sm:$0xf]
      %v331 = vld [vmem:[%s4 + $0x48] sm:$0xf]
      %v332 = vld [vmem:[%s4 + $0x4c] sm:$0xf]
      %v333 = vld [vmem:[%s4 + $0x50] sm:$0xf]
      %v334 = vld [vmem:[%s4 + $0x54] sm:$0xf]
      %v335 = vld [vmem:[%s4 + $0x58] sm:$0xf]
      %v336 = vld [vmem:[%s4 + $0x5c] sm:$0xf]
      %v337 = vld [vmem:[%s4 + $0x60] sm:$0xf]
      %v338 = vld [vmem:[%s4 + $0x64] sm:$0xf]
      %v339 = vld [vmem:[%s4 + $0x68] sm:$0xf]
      %v340 = vld [vmem:[%s4 + $0x6c] sm:$0xf]
      %v341 = vld [vmem:[%s4 + $0x70] sm:$0xf]
      %v342 = vld [vmem:[%s4 + $0x74] sm:$0xf]
      %v343 = vld [vmem:[%s4 + $0x78] sm:$0xf]
      %v344 = vld [vmem:[%s4 + $0x7c] sm:$0xf]
      %v345 = vld [vmem:[%s291] sm:$0xff]
      %v346 = vld [vmem:[%s291 + $0x8] sm:$0xff]
      %v347 = vld [vmem:[%s291 + $0x10] sm:$0xff]
      %v348 = vld [vmem:[%s291 + $0x18] sm:$0x11]
      %v353 = vunpack.c.l.b16 %v345
      %v354 = vunpack.c.h.b16 %v345
      %v355 = vunpack.c.l.b16 %v346
      %v356 = vunpack.c.h.b16 %v346
      %v357 = vunpack.c.l.b16 %v347
      %v358 = vunpack.c.h.b16 %v347
      %v359 = vunpack.c.l.b16 %v348
      %v360 = vunpack.c.h.b16 %v348
      %v361 = vpack.c.b16 %v355, %v353
      %v362 = vpack.c.b16 %v356, %v354
      %v363 = vpack.c.b16 %v359, %v357
      %v364 = vpack.c.b16 %v360, %v358
      %v401 = vunpack.c.l.b16 %v313
      %v402 = vunpack.c.l.b16 %v314
      %v403 = vunpack.c.l.b16 %v315
      %v404 = vunpack.c.l.b16 %v316
      %v405 = vunpack.c.l.b16 %v317
      %v406 = vunpack.c.l.b16 %v318
      %v407 = vunpack.c.l.b16 %v319
      %v408 = vunpack.c.l.b16 %v320
      %v409 = vunpack.c.l.b16 %v321
      %v410 = vunpack.c.l.b16 %v322
      %v411 = vunpack.c.l.b16 %v323
      %v412 = vunpack.c.l.b16 %v324
      %v413 = vunpack.c.l.b16 %v325
      %v414 = vunpack.c.l.b16 %v326
      %v415 = vunpack.c.l.b16 %v327
      %v416 = vunpack.c.l.b16 %v328
      %v417 = vunpack.c.l.b16 %v329
      %v418 = vunpack.c.l.b16 %v330
      %v419 = vunpack.c.l.b16 %v331
      %v420 = vunpack.c.l.b16 %v332
      %v421 = vunpack.c.l.b16 %v333
      %v422 = vunpack.c.l.b16 %v334
      %v423 = vunpack.c.l.b16 %v335
      %v424 = vunpack.c.l.b16 %v336
      %v425 = vunpack.c.l.b16 %v337
      %v426 = vunpack.c.l.b16 %v338
      %v427 = vunpack.c.l.b16 %v339
      %v428 = vunpack.c.l.b16 %v340
      %v429 = vunpack.c.l.b16 %v341
      %v430 = vunpack.c.l.b16 %v342
      %v431 = vunpack.c.l.b16 %v343
      %v432 = vunpack.c.l.b16 %v344
      %v433 = vpack.c.b16 %v402, %v401
      %v434 = vpack.c.b16 %v404, %v403
      %v435 = vpack.c.b16 %v406, %v405
      %v436 = vpack.c.b16 %v408, %v407
      %v437 = vpack.c.b16 %v410, %v409
      %v438 = vpack.c.b16 %v412, %v411
      %v439 = vpack.c.b16 %v414, %v413
      %v440 = vpack.c.b16 %v416, %v415
      %v441 = vpack.c.b16 %v418, %v417
      %v442 = vpack.c.b16 %v420, %v419
      %v443 = vpack.c.b16 %v422, %v421
      %v444 = vpack.c.b16 %v424, %v423
      %v445 = vpack.c.b16 %v426, %v425
      %v446 = vpack.c.b16 %v428, %v427
      %v447 = vpack.c.b16 %v430, %v429
      %v448 = vpack.c.b16 %v432, %v431
      %465 = vmatprep.subr.bf16.mxu0 0
      %466 = vmatpush1.bf16.msra.mxu0 %v433
      %467 = vmatprep.subr.bf16.mxu0 0
      %468 = vmatpush1.bf16.msra.mxu0 %v434
      %469 = vmatprep.subr.bf16.mxu0 0
      %470 = vmatpush1.bf16.msra.mxu0 %v435
      %471 = vmatprep.subr.bf16.mxu0 0
      %472 = vmatpush1.bf16.msra.mxu0 %v436
      %473 = vmatprep.subr.bf16.mxu0 0
      %474 = vmatpush1.bf16.msra.mxu0 %v437
      %475 = vmatprep.subr.bf16.mxu0 0
      %476 = vmatpush1.bf16.msra.mxu0 %v438
      %477 = vmatprep.subr.bf16.mxu0 0
      %478 = vmatpush1.bf16.msra.mxu0 %v439
      %479 = vmatprep.subr.bf16.mxu0 0
      %480 = vmatpush1.bf16.msra.mxu0 %v440
      %481 = vmatprep.subr.bf16.mxu0 0
      %482 = vmatpush1.bf16.msra.mxu0 %v441
      %483 = vmatprep.subr.bf16.mxu0 0
      %484 = vmatpush1.bf16.msra.mxu0 %v442
      %485 = vmatprep.subr.bf16.mxu0 0
      %486 = vmatpush1.bf16.msra.mxu0 %v443
      %487 = vmatprep.subr.bf16.mxu0 0
      %488 = vmatpush1.bf16.msra.mxu0 %v444
      %489 = vmatprep.subr.bf16.mxu0 0
      %490 = vmatpush1.bf16.msra.mxu0 %v445
      %491 = vmatprep.subr.bf16.mxu0 0
      %492 = vmatpush1.bf16.msra.mxu0 %v446
      %493 = vmatprep.subr.bf16.mxu0 0
      %494 = vmatpush1.bf16.msra.mxu0 %v447
      %495 = vmatprep.subr.bf16.mxu0 0
      %496 = vmatpush1.bf16.msra.mxu0 %v448
      %497 = vmatprep.mubr.bf16.mxu0 %v362
      %498 = vmatmul.mubr.bf16.gmra.mrb[0].mxu0 %v361
      %v499 = vpop.f32.mrb[0].mxu0
      %v500 = vadd.f32 0.0, %v499
      %v501 = vpop.f32.mrb[0].mxu0
      %v502 = vpop.f32.mrb[0].mxu0
      %v503 = vadd.f32 0.0, %v502
      %v504 = vpop.f32.mrb[0].mxu0
      %505 = vmatprep.mubr.bf16.mxu0 %v364
      %506 = vmatmul.mubr.bf16.gmra.mrb[0].mxu0 %v363
      %v507 = vpop.f32.mrb[0].mxu0
      %v508 = vadd.f32 0.0, %v507
      %v509 = vpop.f32.mrb[0].mxu0
      %v510 = vpop.f32.mrb[0].mxu0
      %v511 = vadd.f32 0.0, %v510
      %v512 = vpop.f32.mrb[0].mxu0
      %513 = vdwg.mxu0
      %v514 = vld [vmem:[%s296] sm:$0xff]
      %v515 = vld [vmem:[%s296 + $0x8] sm:$0xff]
      %v516 = vld [vmem:[%s296 + $0x10] sm:$0xff]
      %v517 = vld [vmem:[%s296 + $0x18] sm:$0x11]
      %v522 = vunpack.c.l.b16 %v514
      %v523 = vunpack.c.h.b16 %v514
      %v524 = vunpack.c.l.b16 %v515
      %v525 = vunpack.c.h.b16 %v515
      %v526 = vunpack.c.l.b16 %v516
      %v527 = vunpack.c.h.b16 %v516
      %v528 = vunpack.c.l.b16 %v517
      %v529 = vunpack.c.h.b16 %v517
      %v530 = vpack.c.b16 %v524, %v522
      %v531 = vpack.c.b16 %v525, %v523
      %v532 = vpack.c.b16 %v528, %v526
      %v533 = vpack.c.b16 %v529, %v527
      %538 = vmatprep.subr.bf16.mxu0 0
      %539 = vmatpush1.bf16.msra.mxu0 %v433
      %540 = vmatprep.subr.bf16.mxu0 0
      %541 = vmatpush1.bf16.msra.mxu0 %v434
      %542 = vmatprep.subr.bf16.mxu0 0
      %543 = vmatpush1.bf16.msra.mxu0 %v435
      %544 = vmatprep.subr.bf16.mxu0 0
      %545 = vmatpush1.bf16.msra.mxu0 %v436
      %546 = vmatprep.subr.bf16.mxu0 0
      %547 = vmatpush1.bf16.msra.mxu0 %v437
      %548 = vmatprep.subr.bf16.mxu0 0
      %549 = vmatpush1.bf16.msra.mxu0 %v438
      %550 = vmatprep.subr.bf16.mxu0 0
      %551 = vmatpush1.bf16.msra.mxu0 %v439
      %552 = vmatprep.subr.bf16.mxu0 0
      %553 = vmatpush1.bf16.msra.mxu0 %v440
      %554 = vmatprep.subr.bf16.mxu0 0
      %555 = vmatpush1.bf16.msra.mxu0 %v441
      %556 = vmatprep.subr.bf16.mxu0 0
      %557 = vmatpush1.bf16.msra.mxu0 %v442
      %558 = vmatprep.subr.bf16.mxu0 0
      %559 = vmatpush1.bf16.msra.mxu0 %v443
      %560 = vmatprep.subr.bf16.mxu0 0
      %561 = vmatpush1.bf16.msra.mxu0 %v444
      %562 = vmatprep.subr.bf16.mxu0 0
      %563 = vmatpush1.bf16.msra.mxu0 %v445
      %564 = vmatprep.subr.bf16.mxu0 0
      %565 = vmatpush1.bf16.msra.mxu0 %v446
      %566 = vmatprep.subr.bf16.mxu0 0
      %567 = vmatpush1.bf16.msra.mxu0 %v447
      %568 = vmatprep.subr.bf16.mxu0 0
      %569 = vmatpush1.bf16.msra.mxu0 %v448
      %570 = vmatprep.mubr.bf16.mxu0 %v531
      %571 = vmatmul.mubr.bf16.gmra.mrb[0].mxu0 %v530
      %v572 = vpop.f32.mrb[0].mxu0
      %v573 = vadd.f32 0.0, %v572
      %v574 = vpop.f32.mrb[0].mxu0
      %v575 = vpop.f32.mrb[0].mxu0
      %v576 = vadd.f32 0.0, %v575
      %v577 = vpop.f32.mrb[0].mxu0
      %578 = vmatprep.mubr.bf16.mxu0 %v533
      %579 = vmatmul.mubr.bf16.gmra.mrb[0].mxu0 %v532
      %v580 = vpop.f32.mrb[0].mxu0
      %v581 = vadd.f32 0.0, %v580
      %v582 = vpop.f32.mrb[0].mxu0
      %v583 = vpop.f32.mrb[0].mxu0
      %v584 = vadd.f32 0.0, %v583
      %v585 = vpop.f32.mrb[0].mxu0
      %586 = vdwg.mxu0
      %v587 = vmax.f32 %v500, %v573
      %v588 = vmax.f32 %v503, %v576
      %v589 = vmax.f32 %v508, %v581
      %v590 = vmax.f32 %v511, %v584
      %v591 = vld [vmem:[%s301] sm:$0xff]
      %v592 = vld [vmem:[%s301 + $0x8] sm:$0xff]
      %v593 = vld [vmem:[%s301 + $0x10] sm:$0xff]
      %v594 = vld [vmem:[%s301 + $0x18] sm:$0x11]
      %v599 = vunpack.c.l.b16 %v591
      %v600 = vunpack.c.h.b16 %v591
      %v601 = vunpack.c.l.b16 %v592
      %v602 = vunpack.c.h.b16 %v592
      %v603 = vunpack.c.l.b16 %v593
      %v604 = vunpack.c.h.b16 %v593
      %v605 = vunpack.c.l.b16 %v594
      %v606 = vunpack.c.h.b16 %v594
      %v607 = vpack.c.b16 %v601, %v599
      %v608 = vpack.c.b16 %v602, %v600
      %v609 = vpack.c.b16 %v605, %v603
      %v610 = vpack.c.b16 %v606, %v604
      %615 = vmatprep.subr.bf16.mxu0 0
      %616 = vmatpush1.bf16.msra.mxu0 %v433
      %617 = vmatprep.subr.bf16.mxu0 0
      %618 = vmatpush1.bf16.msra.mxu0 %v434
      %619 = vmatprep.subr.bf16.mxu0 0
      %620 = vmatpush1.bf16.msra.mxu0 %v435
      %621 = vmatprep.subr.bf16.mxu0 0
      %622 = vmatpush1.bf16.msra.mxu0 %v436
      %623 = vmatprep.subr.bf16.mxu0 0
      %624 = vmatpush1.bf16.msra.mxu0 %v437
      %625 = vmatprep.subr.bf16.mxu0 0
      %626 = vmatpush1.bf16.msra.mxu0 %v438
      %627 = vmatprep.subr.bf16.mxu0 0
      %628 = vmatpush1.bf16.msra.mxu0 %v439
      %629 = vmatprep.subr.bf16.mxu0 0
      %630 = vmatpush1.bf16.msra.mxu0 %v440
      %631 = vmatprep.subr.bf16.mxu0 0
      %632 = vmatpush1.bf16.msra.mxu0 %v441
      %633 = vmatprep.subr.bf16.mxu0 0
      %634 = vmatpush1.bf16.msra.mxu0 %v442
      %635 = vmatprep.subr.bf16.mxu0 0
      %636 = vmatpush1.bf16.msra.mxu0 %v443
      %637 = vmatprep.subr.bf16.mxu0 0
      %638 = vmatpush1.bf16.msra.mxu0 %v444
      %639 = vmatprep.subr.bf16.mxu0 0
      %640 = vmatpush1.bf16.msra.mxu0 %v445
      %641 = vmatprep.subr.bf16.mxu0 0
      %642 = vmatpush1.bf16.msra.mxu0 %v446
      %643 = vmatprep.subr.bf16.mxu0 0
      %644 = vmatpush1.bf16.msra.mxu0 %v447
      %645 = vmatprep.subr.bf16.mxu0 0
      %646 = vmatpush1.bf16.msra.mxu0 %v448
      %647 = vmatprep.mubr.bf16.mxu0 %v608
      %648 = vmatmul.mubr.bf16.gmra.mrb[0].mxu0 %v607
      %v649 = vpop.f32.mrb[0].mxu0
      %v650 = vadd.f32 0.0, %v649
      %v651 = vpop.f32.mrb[0].mxu0
      %v652 = vpop.f32.mrb[0].mxu0
      %v653 = vadd.f32 0.0, %v652
      %v654 = vpop.f32.mrb[0].mxu0
      %655 = vmatprep.mubr.bf16.mxu0 %v610
      %656 = vmatmul.mubr.bf16.gmra.mrb[0].mxu0 %v609
      %v657 = vpop.f32.mrb[0].mxu0
      %v658 = vadd.f32 0.0, %v657
      %v659 = vpop.f32.mrb[0].mxu0
      %v660 = vpop.f32.mrb[0].mxu0
      %v661 = vadd.f32 0.0, %v660
      %v662 = vpop.f32.mrb[0].mxu0
      %663 = vdwg.mxu0
      %v664 = vld [vmem:[%s306] sm:$0xff]
      %v665 = vld [vmem:[%s306 + $0x8] sm:$0xff]
      %v666 = vld [vmem:[%s306 + $0x10] sm:$0xff]
      %v667 = vld [vmem:[%s306 + $0x18] sm:$0x11]
      %v672 = vunpack.c.l.b16 %v664
      %v673 = vunpack.c.h.b16 %v664
      %v674 = vunpack.c.l.b16 %v665
      %v675 = vunpack.c.h.b16 %v665
      %v676 = vunpack.c.l.b16 %v666
      %v677 = vunpack.c.h.b16 %v666
      %v678 = vunpack.c.l.b16 %v667
      %v679 = vunpack.c.h.b16 %v667
      %v680 = vpack.c.b16 %v674, %v672
      %v681 = vpack.c.b16 %v675, %v673
      %v682 = vpack.c.b16 %v678, %v676
      %v683 = vpack.c.b16 %v679, %v677
      %688 = vmatprep.subr.bf16.mxu0 0
      %689 = vmatpush1.bf16.msra.mxu0 %v433
      %690 = vmatprep.subr.bf16.mxu0 0
      %691 = vmatpush1.bf16.msra.mxu0 %v434
      %692 = vmatprep.subr.bf16.mxu0 0
      %693 = vmatpush1.bf16.msra.mxu0 %v435
      %694 = vmatprep.subr.bf16.mxu0 0
      %695 = vmatpush1.bf16.msra.mxu0 %v436
      %696 = vmatprep.subr.bf16.mxu0 0
      %697 = vmatpush1.bf16.msra.mxu0 %v437
      %698 = vmatprep.subr.bf16.mxu0 0
      %699 = vmatpush1.bf16.msra.mxu0 %v438
      %700 = vmatprep.subr.bf16.mxu0 0
      %701 = vmatpush1.bf16.msra.mxu0 %v439
      %702 = vmatprep.subr.bf16.mxu0 0
      %703 = vmatpush1.bf16.msra.mxu0 %v440
      %704 = vmatprep.subr.bf16.mxu0 0
      %705 = vmatpush1.bf16.msra.mxu0 %v441
      %706 = vmatprep.subr.bf16.mxu0 0
      %707 = vmatpush1.bf16.msra.mxu0 %v442
      %708 = vmatprep.subr.bf16.mxu0 0
      %709 = vmatpush1.bf16.msra.mxu0 %v443
      %710 = vmatprep.subr.bf16.mxu0 0
      %711 = vmatpush1.bf16.msra.mxu0 %v444
      %712 = vmatprep.subr.bf16.mxu0 0
      %713 = vmatpush1.bf16.msra.mxu0 %v445
      %714 = vmatprep.subr.bf16.mxu0 0
      %715 = vmatpush1.bf16.msra.mxu0 %v446
      %716 = vmatprep.subr.bf16.mxu0 0
      %717 = vmatpush1.bf16.msra.mxu0 %v447
      %718 = vmatprep.subr.bf16.mxu0 0
      %719 = vmatpush1.bf16.msra.mxu0 %v448
      %720 = vmatprep.mubr.bf16.mxu0 %v681
      %721 = vmatmul.mubr.bf16.gmra.mrb[0].mxu0 %v680
      %v722 = vpop.f32.mrb[0].mxu0
      %v723 = vadd.f32 0.0, %v722
      %v724 = vpop.f32.mrb[0].mxu0
      %v725 = vpop.f32.mrb[0].mxu0
      %v726 = vadd.f32 0.0, %v725
      %v727 = vpop.f32.mrb[0].mxu0
      %728 = vmatprep.mubr.bf16.mxu0 %v683
      %729 = vmatmul.mubr.bf16.gmra.mrb[0].mxu0 %v682
      %v730 = vpop.f32.mrb[0].mxu0
      %v731 = vadd.f32 0.0, %v730
      %v732 = vpop.f32.mrb[0].mxu0
      %v733 = vpop.f32.mrb[0].mxu0
      %v734 = vadd.f32 0.0, %v733
      %v735 = vpop.f32.mrb[0].mxu0
      %736 = vdwg.mxu0
      %v737 = vmax.f32 %v650, %v723
      %v738 = vmax.f32 %v653, %v726
      %v739 = vmax.f32 %v658, %v731
      %v740 = vmax.f32 %v661, %v734
      %v741 = vmax.f32 %v587, %v737
      %v742 = vmax.f32 %v588, %v738
      %v743 = vmax.f32 %v589, %v739
      %v744 = vmax.f32 %v590, %v740
      %v745 = vld [vmem:[%s5] sm:$0x1]
      %v747 = vlaneseq
      %v748 = vshrl.u32 %v747, 7
      %v749 = vsub.s32 0, %v748
      %v750 = vrot.slane %v745, %v749
      %v752 = vadd.f32 %v741, %v750
      %v753 = vadd.f32 %v742, %v750
      %v754 = vadd.f32 %v743, %v750
      %v755 = vadd.f32 %v744, %v750
      %v756 = vmax.f32 %v752, 0.0
      %v757 = vmax.f32 %v753, 0.0
      %v758 = vmax.f32 %v754, 0.0
      %v759 = vmax.f32 %v755, 0.0
      %v760 = vpack.c.bf16 %v757, %v756
      %v761 = vpack.c.bf16 %v759, %v758
      %v764 = vunpack.c.l.b16 %v760
      %v765 = vunpack.c.h.b16 %v760
      %v766 = vunpack.c.l.b16 %v761
      %v767 = vunpack.c.h.b16 %v761
      %v768 = vpack.c.b16 %v764, %v764
      %v769 = vpack.c.b16 %v765, %v765
      %v770 = vpack.c.b16 %v766, %v766
      %v771 = vpack.c.b16 %v767, %v767
      %776 = vst [vmem:[%s311] sm:$0xf] %v768
      %777 = vst [vmem:[%s311 + $0x4] sm:$0xf] %v769
      %778 = vst [vmem:[%s311 + $0x8] sm:$0xf] %v770
      %vm779 = vcmask 1040384
      %vm780 = vsmask.f32 256
      %vm781 = vmand %vm779, %vm780
      %v782 = vld [vmem:[%s311 + $0xc] sm:$0x1]
      %v783 = vsel %vm781, %v771, %v782
      %784 = vst [vmem:[%s311 + $0xc] sm:$0x1] %v783
      %p785 = scmp.lt.s32.totalorder %s17, 1
      %s786 = scalar_select %p785, %s17, 1
      %s787 = smul.addr %s786, 4
      %s788 = smul.addr %s787, 4
      %s789 = scalar_lea.vmem %s6, %s788
      // Predicated region
      $region45: #{forward.4} parent=43 // pred_check
        %p790 = pneg %p181
      $region46: #{forward.4} parent=43 // pred_check_branch
        %792 = sbr.rel (%p790) target = $region48
      $region47: #{forward.4} parent=43 // pred_region
        _
      $region48: #{forward.4} parent=43 // pred_fallthru
        _
    $region44: #{forward.4} parent=5 // pred_fallthru
      _
    %p793 = scmp.le.s32.totalorder 2, %s12
    // Predicated region
    $region49: #{forward.4} parent=5 // pred_check
      %p794 = pneg %p793
    $region50: #{forward.4} parent=5 // pred_check_branch
      %796 = sbr.rel (%p794) target = $region52
    $region51: #{forward.4} parent=5 // pred_region
      %s797 = ssub.s32 %s12, 2
      // Predicated region
      $region53: #{forward.4} parent=51 // pred_check
        %p798 = pneg %p187
      $region54: #{forward.4} parent=51 // pred_check_branch
        %800 = sbr.rel (%p798) target = $region56
      $region55: #{forward.4} parent=51 // pred_region
        %p801 = scmp.lt.s32.totalorder %s18, 1
        %s802 = scalar_select %p801, %s18, 1
        %s803 = smul.addr %s802, 4
        %s804 = smul.addr %s803, 4
        %s805 = scalar_lea.vmem %s6, %s804
      $region56: #{forward.4} parent=51 // pred_fallthru
        _
    $region52: #{forward.4} parent=5 // pred_fallthru
      _
  $region6: #{forward.4} parent=0 // loop_footer
    %s16 = sadd.s32 1, %s12
  $region7: #{forward.4} parent=0 // loop_footer_branch
    %11 = sbr.rel target = $region3
  $region8: #{forward.4} parent=0 // loop_exit
    _

// kernel: forward.5
$region0: #{forward.5}
  #allocation0 [shape = 'u32[]', space=smem, size = 0x4, offset = 0x4, fixed_abs, tag = 'smem constant byte address 0x4 - core index']
  #allocation1 [shape = 'u32[144,128]{1,0:T(1,128)}', space=vmem, size = 0x12000, scoped, tag = 'internal scratch']
  %s0 = inlined_call_operand.vmem [shape: bf16[8,400], index: 0, kind: input, shape index: {}]
  %s1 = inlined_call_operand.vmem [shape: bf16[400,128], index: 1, kind: input, shape index: {}]
  %s2 = inlined_call_operand.vmem [shape: f32[1,128], index: 2, kind: input, shape index: {}]
  %s3 = inlined_call_operand.vmem [shape: bf16[128,128], index: 3, kind: input, shape index: {}]
  %s4 = inlined_call_operand.vmem [shape: f32[1,128], index: 4, kind: input, shape index: {}]
  %s5 = inlined_call_operand.vmem [shape: bf16[128,128], index: 5, kind: input, shape index: {}]
  %s6 = inlined_call_operand.vmem [shape: f32[1,128], index: 6, kind: input, shape index: {}]
  %s7 = inlined_call_operand.vmem [shape: f32[8,128], index: 7, kind: output, shape index: {}]
  %s8 = sld [smem:[#allocation0]]
  $region38: #{forward.5} parent=0
    _
  %s10 = ssub.s32 1, %s8
  %s11 = scalar_select 0, %s10, %s8
  // Predicated region
  $region2: #{forward.5} parent=0 // pred_check
    _
  $region3: #{forward.5} parent=0 // pred_check_branch
    %13 = sbr.rel (0) target = $region5
  $region4: #{forward.5} parent=0 // pred_region
    _
  $region5: #{forward.5} parent=0 // pred_fallthru
    _
  // Predicated region
  $region6: #{forward.5} parent=0 // pred_check
    _
  $region7: #{forward.5} parent=0 // pred_check_branch
    %15 = sbr.rel (0) target = $region9
  $region8: #{forward.5} parent=0 // pred_region
    _
  $region9: #{forward.5} parent=0 // pred_fallthru
    _
  // Predicated region
  $region10: #{forward.5} parent=0 // pred_check
    _
  $region11: #{forward.5} parent=0 // pred_check_branch
    %17 = sbr.rel (0) target = $region13
  $region12: #{forward.5} parent=0 // pred_region
    _
  $region13: #{forward.5} parent=0 // pred_fallthru
    _
  // Predicated region
  $region14: #{forward.5} parent=0 // pred_check
    _
  $region15: #{forward.5} parent=0 // pred_check_branch
    %19 = sbr.rel (0) target = $region17
  $region16: #{forward.5} parent=0 // pred_region
    _
  $region17: #{forward.5} parent=0 // pred_fallthru
    _
  // Predicated region
  $region18: #{forward.5} parent=0 // pred_check
    _
  $region19: #{forward.5} parent=0 // pred_check_branch
    %21 = sbr.rel (0) target = $region21
  $region20: #{forward.5} parent=0 // pred_region
    _
  $region21: #{forward.5} parent=0 // pred_fallthru
    _
  // Predicated region
  $region22: #{forward.5} parent=0 // pred_check
    _
  $region23: #{forward.5} parent=0 // pred_check_branch
    %23 = sbr.rel (0) target = $region25
  $region24: #{forward.5} parent=0 // pred_region
    _
  $region25: #{forward.5} parent=0 // pred_fallthru
    _
  // Predicated region
  $region26: #{forward.5} parent=0 // pred_check
    _
  $region27: #{forward.5} parent=0 // pred_check_branch
    %25 = sbr.rel (0) target = $region29
  $region28: #{forward.5} parent=0 // pred_region
    _
  $region29: #{forward.5} parent=0 // pred_fallthru
    _
  %v27 = vld [vmem:[%s0] sm:$0xff]
  %v28 = vld [vmem:[%s0 + $0x8] sm:$0xff]
  %v29 = vld [vmem:[%s1] sm:$0xf]
  %v30 = vld [vmem:[%s1 + $0x4] sm:$0xf]
  %v31 = vld [vmem:[%s1 + $0x8] sm:$0xf]
  %v32 = vld [vmem:[%s1 + $0xc] sm:$0xf]
  %v33 = vld [vmem:[%s1 + $0x10] sm:$0xf]
  %v34 = vld [vmem:[%s1 + $0x14] sm:$0xf]
  %v35 = vld [vmem:[%s1 + $0x18] sm:$0xf]
  %v36 = vld [vmem:[%s1 + $0x1c] sm:$0xf]
  %v37 = vld [vmem:[%s1 + $0x20] sm:$0xf]
  %v38 = vld [vmem:[%s1 + $0x24] sm:$0xf]
  %v39 = vld [vmem:[%s1 + $0x28] sm:$0xf]
  %v40 = vld [vmem:[%s1 + $0x2c] sm:$0xf]
  %v41 = vld [vmem:[%s1 + $0x30] sm:$0xf]
  %v42 = vld [vmem:[%s1 + $0x34] sm:$0xf]
  %v43 = vld [vmem:[%s1 + $0x38] sm:$0xf]
  %v44 = vld [vmem:[%s1 + $0x3c] sm:$0xf]
  %v45 = vld [vmem:[%s1 + $0x40] sm:$0xf]
  %v46 = vld [vmem:[%s1 + $0x44] sm:$0xf]
  %v47 = vld [vmem:[%s1 + $0x48] sm:$0xf]
  %v48 = vld [vmem:[%s1 + $0x4c] sm:$0xf]
  %v49 = vld [vmem:[%s1 + $0x50] sm:$0xf]
  %v50 = vld [vmem:[%s1 + $0x54] sm:$0xf]
  %v51 = vld [vmem:[%s1 + $0x58] sm:$0xf]
  %v52 = vld [vmem:[%s1 + $0x5c] sm:$0xf]
  %v53 = vld [vmem:[%s1 + $0x60] sm:$0xf]
  %v54 = vld [vmem:[%s1 + $0x64] sm:$0xf]
  %v55 = vld [vmem:[%s1 + $0x68] sm:$0xf]
  %v56 = vld [vmem:[%s1 + $0x6c] sm:$0xf]
  %v57 = vld [vmem:[%s1 + $0x70] sm:$0xf]
  %v58 = vld [vmem:[%s1 + $0x74] sm:$0xf]
  %v59 = vld [vmem:[%s1 + $0x78] sm:$0xf]
  %v60 = vld [vmem:[%s1 + $0x7c] sm:$0xf]
  %v61 = vld [vmem:[%s1 + $0x80] sm:$0xf]
  %v62 = vld [vmem:[%s1 + $0x84] sm:$0xf]
  %v63 = vld [vmem:[%s1 + $0x88] sm:$0xf]
  %v64 = vld [vmem:[%s1 + $0x8c] sm:$0xf]
  %v65 = vld [vmem:[%s1 + $0x90] sm:$0xf]
  %v66 = vld [vmem:[%s1 + $0x94] sm:$0xf]
  %v67 = vld [vmem:[%s1 + $0x98] sm:$0xf]
  %v68 = vld [vmem:[%s1 + $0x9c] sm:$0xf]
  %v69 = vld [vmem:[%s1 + $0xa0] sm:$0xf]
  %v70 = vld [vmem:[%s1 + $0xa4] sm:$0xf]
  %v71 = vld [vmem:[%s1 + $0xa8] sm:$0xf]
  %v72 = vld [vmem:[%s1 + $0xac] sm:$0xf]
  %v73 = vld [vmem:[%s1 + $0xb0] sm:$0xf]
  %v74 = vld [vmem:[%s1 + $0xb4] sm:$0xf]
  %v75 = vld [vmem:[%s1 + $0xb8] sm:$0xf]
  %v76 = vld [vmem:[%s1 + $0xbc] sm:$0xf]
  %v77 = vld [vmem:[%s1 + $0xc0] sm:$0xf]
  %v78 = vld [vmem:[%s1 + $0xc4] sm:$0xf]
  %v79 = vld [vmem:[%s2] sm:$0x1]
  %v81 = vlaneseq
  %v82 = vshrl.u32 %v81, 7
  %v83 = vsub.s32 0, %v82
  %v84 = vrot.slane %v79, %v83
  %v88 = vunpack.c.l.b16 %v27
  %v89 = vunpack.c.h.b16 %v27
  %v90 = vunpack.c.l.b16 %v28
  %v91 = vunpack.c.h.b16 %v28
  %v92 = vpack.c.b16 %v88, %v88
  %v93 = vpack.c.b16 %v89, %v89
  %v94 = vpack.c.b16 %v90, %v90
  %v95 = vpack.c.b16 %v91, %v91
  %v149 = vunpack.c.l.b16 %v29
  %v150 = vunpack.c.l.b16 %v30
  %v151 = vunpack.c.l.b16 %v31
  %v152 = vunpack.c.l.b16 %v32
  %v153 = vunpack.c.l.b16 %v33
  %v154 = vunpack.c.l.b16 %v34
  %v155 = vunpack.c.l.b16 %v35
  %v156 = vunpack.c.l.b16 %v36
  %v157 = vunpack.c.l.b16 %v37
  %v158 = vunpack.c.l.b16 %v38
  %v159 = vunpack.c.l.b16 %v39
  %v160 = vunpack.c.l.b16 %v40
  %v161 = vunpack.c.l.b16 %v41
  %v162 = vunpack.c.l.b16 %v42
  %v163 = vunpack.c.l.b16 %v43
  %v164 = vunpack.c.l.b16 %v44
  %v165 = vunpack.c.l.b16 %v45
  %v166 = vunpack.c.l.b16 %v46
  %v167 = vunpack.c.l.b16 %v47
  %v168 = vunpack.c.l.b16 %v48
  %v169 = vunpack.c.l.b16 %v49
  %v170 = vunpack.c.l.b16 %v50
  %v171 = vunpack.c.l.b16 %v51
  %v172 = vunpack.c.l.b16 %v52
  %v173 = vunpack.c.l.b16 %v53
  %v174 = vunpack.c.l.b16 %v54
  %v175 = vunpack.c.l.b16 %v55
  %v176 = vunpack.c.l.b16 %v56
  %v177 = vunpack.c.l.b16 %v57
  %v178 = vunpack.c.l.b16 %v58
  %v179 = vunpack.c.l.b16 %v59
  %v180 = vunpack.c.l.b16 %v60
  %v181 = vunpack.c.l.b16 %v61
  %v182 = vunpack.c.l.b16 %v62
  %v183 = vunpack.c.l.b16 %v63
  %v184 = vunpack.c.l.b16 %v64
  %v185 = vunpack.c.l.b16 %v65
  %v186 = vunpack.c.l.b16 %v66
  %v187 = vunpack.c.l.b16 %v67
  %v188 = vunpack.c.l.b16 %v68
  %v189 = vunpack.c.l.b16 %v69
  %v190 = vunpack.c.l.b16 %v70
  %v191 = vunpack.c.l.b16 %v71
  %v192 = vunpack.c.l.b16 %v72
  %v193 = vunpack.c.l.b16 %v73
  %v194 = vunpack.c.l.b16 %v74
  %v195 = vunpack.c.l.b16 %v75
  %v196 = vunpack.c.l.b16 %v76
  %v197 = vunpack.c.l.b16 %v77
  %v198 = vunpack.c.l.b16 %v78
  %v199 = vpack.c.b16 %v150, %v149
  %v200 = vpack.c.b16 %v152, %v151
  %v201 = vpack.c.b16 %v154, %v153
  %v202 = vpack.c.b16 %v156, %v155
  %v203 = vpack.c.b16 %v158, %v157
  %v204 = vpack.c.b16 %v160, %v159
  %v205 = vpack.c.b16 %v162, %v161
  %v206 = vpack.c.b16 %v164, %v163
  %v207 = vpack.c.b16 %v166, %v165
  %v208 = vpack.c.b16 %v168, %v167
  %v209 = vpack.c.b16 %v170, %v169
  %v210 = vpack.c.b16 %v172, %v171
  %v211 = vpack.c.b16 %v174, %v173
  %v212 = vpack.c.b16 %v176, %v175
  %v213 = vpack.c.b16 %v178, %v177
  %v214 = vpack.c.b16 %v180, %v179
  %v215 = vpack.c.b16 %v182, %v181
  %v216 = vpack.c.b16 %v184, %v183
  %v217 = vpack.c.b16 %v186, %v185
  %v218 = vpack.c.b16 %v188, %v187
  %v219 = vpack.c.b16 %v190, %v189
  %v220 = vpack.c.b16 %v192, %v191
  %v221 = vpack.c.b16 %v194, %v193
  %v222 = vpack.c.b16 %v196, %v195
  %v223 = vpack.c.b16 %v198, %v197
  %vm249 = vcmask 130048
  %v251 = vsel %vm249, %v95, 0
  %253 = vmatprep.subr.bf16.mxu0 0
  %254 = vmatpush1.bf16.msra.mxu0 %v199
  %255 = vmatprep.subr.bf16.mxu0 0
  %256 = vmatpush1.bf16.msra.mxu0 %v200
  %257 = vmatprep.subr.bf16.mxu0 0
  %258 = vmatpush1.bf16.msra.mxu0 %v201
  %259 = vmatprep.subr.bf16.mxu0 0
  %260 = vmatpush1.bf16.msra.mxu0 %v202
  %261 = vmatprep.subr.bf16.mxu0 0
  %262 = vmatpush1.bf16.msra.mxu0 %v203
  %263 = vmatprep.subr.bf16.mxu0 0
  %264 = vmatpush1.bf16.msra.mxu0 %v204
  %265 = vmatprep.subr.bf16.mxu0 0
  %266 = vmatpush1.bf16.msra.mxu0 %v205
  %267 = vmatprep.subr.bf16.mxu0 0
  %268 = vmatpush1.bf16.msra.mxu0 %v206
  %269 = vmatprep.subr.bf16.mxu0 0
  %270 = vmatpush1.bf16.msra.mxu0 %v207
  %271 = vmatprep.subr.bf16.mxu0 0
  %272 = vmatpush1.bf16.msra.mxu0 %v208
  %273 = vmatprep.subr.bf16.mxu0 0
  %274 = vmatpush1.bf16.msra.mxu0 %v209
  %275 = vmatprep.subr.bf16.mxu0 0
  %276 = vmatpush1.bf16.msra.mxu0 %v210
  %277 = vmatprep.subr.bf16.mxu0 0
  %278 = vmatpush1.bf16.msra.mxu0 %v211
  %279 = vmatprep.subr.bf16.mxu0 0
  %280 = vmatpush1.bf16.msra.mxu0 %v212
  %281 = vmatprep.subr.bf16.mxu0 0
  %282 = vmatpush1.bf16.msra.mxu0 %v213
  %283 = vmatprep.subr.bf16.mxu0 0
  %284 = vmatpush1.bf16.msra.mxu0 %v214
  %285 = vmatprep.mubr.bf16.mxu0 %v93
  %286 = vmatmul.mubr.bf16.gmra.mrb[0].mxu0 %v92
  %v287 = vpop.f32.mrb[0].mxu0
  %v288 = vadd.f32 %v84, %v287
  %v289 = vpop.f32.mrb[0].mxu0
  %v290 = vpop.f32.mrb[0].mxu0
  %v291 = vpop.f32.mrb[0].mxu0
  %292 = vdwg.mxu0
  %293 = vmatprep.subr.bf16.mxu0 0
  %294 = vmatpush1.bf16.msra.mxu0 %v215
  %295 = vmatprep.subr.bf16.mxu0 0
  %296 = vmatpush1.bf16.msra.mxu0 %v216
  %297 = vmatprep.subr.bf16.mxu0 0
  %298 = vmatpush1.bf16.msra.mxu0 %v217
  %299 = vmatprep.subr.bf16.mxu0 0
  %300 = vmatpush1.bf16.msra.mxu0 %v218
  %301 = vmatprep.subr.bf16.mxu0 0
  %302 = vmatpush1.bf16.msra.mxu0 %v219
  %303 = vmatprep.subr.bf16.mxu0 0
  %304 = vmatpush1.bf16.msra.mxu0 %v220
  %305 = vmatprep.subr.bf16.mxu0 0
  %306 = vmatpush1.bf16.msra.mxu0 %v221
  %307 = vmatprep.subr.bf16.mxu0 0
  %308 = vmatpush1.bf16.msra.mxu0 %v222
  %309 = vmatprep.subr.bf16.mxu0 0
  %310 = vmatpush1.bf16.msra.mxu0 %v223
  %311 = vmatprep.subr.bf16.mxu0 0
  %312 = vmatpush1.bf16.msra.mxu0 0
  %313 = vmatprep.subr.bf16.mxu0 0
  %314 = vmatpush1.bf16.msra.mxu0 0
  %315 = vmatprep.subr.bf16.mxu0 0
  %316 = vmatpush1.bf16.msra.mxu0 0
  %317 = vmatprep.subr.bf16.mxu0 0
  %318 = vmatpush1.bf16.msra.mxu0 0
  %319 = vmatprep.subr.bf16.mxu0 0
  %320 = vmatpush1.bf16.msra.mxu0 0
  %321 = vmatprep.subr.bf16.mxu0 0
  %322 = vmatpush1.bf16.msra.mxu0 0
  %323 = vmatprep.subr.bf16.mxu0 0
  %324 = vmatpush1.bf16.msra.mxu0 0
  %325 = vmatprep.mubr.bf16.mxu0 %v251
  %326 = vmatmul.mubr.bf16.gmra.mrb[0].mxu0 %v94
  %v327 = vpop.f32.mrb[0].mxu0
  %v328 = vadd.f32 %v288, %v327
  %v329 = vpop.f32.mrb[0].mxu0
  %v330 = vpop.f32.mrb[0].mxu0
  %v331 = vpop.f32.mrb[0].mxu0
  %332 = vdwg.mxu0
  %v333 = vmax.f32 %v328, 0.0
  %v334 = vpack.c.bf16 %v333, %v333
  %v335 = vld [vmem:[%s3] sm:$0xf]
  %v336 = vld [vmem:[%s3 + $0x4] sm:$0xf]
  %v337 = vld [vmem:[%s3 + $0x8] sm:$0xf]
  %v338 = vld [vmem:[%s3 + $0xc] sm:$0xf]
  %v339 = vld [vmem:[%s3 + $0x10] sm:$0xf]
  %v340 = vld [vmem:[%s3 + $0x14] sm:$0xf]
  %v341 = vld [vmem:[%s3 + $0x18] sm:$0xf]
  %v342 = vld [vmem:[%s3 + $0x1c] sm:$0xf]
  %v343 = vld [vmem:[%s3 + $0x20] sm:$0xf]
  %v344 = vld [vmem:[%s3 + $0x24] sm:$0xf]
  %v345 = vld [vmem:[%s3 + $0x28] sm:$0xf]
  %v346 = vld [vmem:[%s3 + $0x2c] sm:$0xf]
  %v347 = vld [vmem:[%s3 + $0x30] sm:$0xf]
  %v348 = vld [vmem:[%s3 + $0x34] sm:$0xf]
  %v349 = vld [vmem:[%s3 + $0x38] sm:$0xf]
  %v350 = vld [vmem:[%s3 + $0x3c] sm:$0xf]
  %v351 = vld [vmem:[%s4] sm:$0x1]
  %v353 = vlaneseq
  %v354 = vshrl.u32 %v353, 7
  %v355 = vsub.s32 0, %v354
  %v356 = vrot.slane %v351, %v355
  %v374 = vunpack.c.l.b16 %v335
  %v375 = vunpack.c.l.b16 %v336
  %v376 = vunpack.c.l.b16 %v337
  %v377 = vunpack.c.l.b16 %v338
  %v378 = vunpack.c.l.b16 %v339
  %v379 = vunpack.c.l.b16 %v340
  %v380 = vunpack.c.l.b16 %v341
  %v381 = vunpack.c.l.b16 %v342
  %v382 = vunpack.c.l.b16 %v343
  %v383 = vunpack.c.l.b16 %v344
  %v384 = vunpack.c.l.b16 %v345
  %v385 = vunpack.c.l.b16 %v346
  %v386 = vunpack.c.l.b16 %v347
  %v387 = vunpack.c.l.b16 %v348
  %v388 = vunpack.c.l.b16 %v349
  %v389 = vunpack.c.l.b16 %v350
  %v390 = vpack.c.b16 %v375, %v374
  %v391 = vpack.c.b16 %v377, %v376
  %v392 = vpack.c.b16 %v379, %v378
  %v393 = vpack.c.b16 %v381, %v380
  %v394 = vpack.c.b16 %v383, %v382
  %v395 = vpack.c.b16 %v385, %v384
  %v396 = vpack.c.b16 %v387, %v386
  %v397 = vpack.c.b16 %v389, %v388
  %406 = vmatprep.subr.bf16.mxu0 0
  %407 = vmatpush1.bf16.msra.mxu0 %v390
  %408 = vmatprep.subr.bf16.mxu0 0
  %409 = vmatpush1.bf16.msra.mxu0 %v391
  %410 = vmatprep.subr.bf16.mxu0 0
  %411 = vmatpush1.bf16.msra.mxu0 %v392
  %412 = vmatprep.subr.bf16.mxu0 0
  %413 = vmatpush1.bf16.msra.mxu0 %v393
  %414 = vmatprep.subr.bf16.mxu0 0
  %415 = vmatpush1.bf16.msra.mxu0 %v394
  %416 = vmatprep.subr.bf16.mxu0 0
  %417 = vmatpush1.bf16.msra.mxu0 %v395
  %418 = vmatprep.subr.bf16.mxu0 0
  %419 = vmatpush1.bf16.msra.mxu0 %v396
  %420 = vmatprep.subr.bf16.mxu0 0
  %421 = vmatpush1.bf16.msra.mxu0 %v397
  %422 = vmatprep.subr.bf16.mxu0 0
  %423 = vmatpush1.bf16.msra.mxu0 0
  %424 = vmatprep.subr.bf16.mxu0 0
  %425 = vmatpush1.bf16.msra.mxu0 0
  %426 = vmatprep.subr.bf16.mxu0 0
  %427 = vmatpush1.bf16.msra.mxu0 0
  %428 = vmatprep.subr.bf16.mxu0 0
  %429 = vmatpush1.bf16.msra.mxu0 0
  %430 = vmatprep.subr.bf16.mxu0 0
  %431 = vmatpush1.bf16.msra.mxu0 0
  %432 = vmatprep.subr.bf16.mxu0 0
  %433 = vmatpush1.bf16.msra.mxu0 0
  %434 = vmatprep.subr.bf16.mxu0 0
  %435 = vmatpush1.bf16.msra.mxu0 0
  %436 = vmatprep.subr.bf16.mxu0 0
  %437 = vmatpush1.bf16.msra.mxu0 0
  %438 = vmatprep.mubr.bf16.mxu0 0
  %439 = vmatmul.mubr.bf16.gmra.mrb[0].mxu0 %v334
  %v440 = vpop.f32.mrb[0].mxu0
  %v441 = vadd.f32 %v356, %v440
  %v442 = vpop.f32.mrb[0].mxu0
  %v443 = vpop.f32.mrb[0].mxu0
  %v444 = vpop.f32.mrb[0].mxu0
  %445 = vdwg.mxu0
  %v446 = vmax.f32 %v441, 0.0
  %v447 = vpack.c.bf16 %v446, %v446
  %v448 = vld [vmem:[%s5] sm:$0xf]
  %v449 = vld [vmem:[%s5 + $0x4] sm:$0xf]
  %v450 = vld [vmem:[%s5 + $0x8] sm:$0xf]
  %v451 = vld [vmem:[%s5 + $0xc] sm:$0xf]
  %v452 = vld [vmem:[%s5 + $0x10] sm:$0xf]
  %v453 = vld [vmem:[%s5 + $0x14] sm:$0xf]
  %v454 = vld [vmem:[%s5 + $0x18] sm:$0xf]
  %v455 = vld [vmem:[%s5 + $0x1c] sm:$0xf]
  %v456 = vld [vmem:[%s5 + $0x20] sm:$0xf]
  %v457 = vld [vmem:[%s5 + $0x24] sm:$0xf]
  %v458 = vld [vmem:[%s5 + $0x28] sm:$0xf]
  %v459 = vld [vmem:[%s5 + $0x2c] sm:$0xf]
  %v460 = vld [vmem:[%s5 + $0x30] sm:$0xf]
  %v461 = vld [vmem:[%s5 + $0x34] sm:$0xf]
  %v462 = vld [vmem:[%s5 + $0x38] sm:$0xf]
  %v463 = vld [vmem:[%s5 + $0x3c] sm:$0xf]
  %v464 = vld [vmem:[%s6] sm:$0x1]
  %v466 = vlaneseq
  %v467 = vshrl.u32 %v466, 7
  %v468 = vsub.s32 0, %v467
  %v469 = vrot.slane %v464, %v468
  %v487 = vunpack.c.l.b16 %v448
  %v488 = vunpack.c.l.b16 %v449
  %v489 = vunpack.c.l.b16 %v450
  %v490 = vunpack.c.l.b16 %v451
  %v491 = vunpack.c.l.b16 %v452
  %v492 = vunpack.c.l.b16 %v453
  %v493 = vunpack.c.l.b16 %v454
  %v494 = vunpack.c.l.b16 %v455
  %v495 = vunpack.c.l.b16 %v456
  %v496 = vunpack.c.l.b16 %v457
  %v497 = vunpack.c.l.b16 %v458
  %v498 = vunpack.c.l.b16 %v459
  %v499 = vunpack.c.l.b16 %v460
  %v500 = vunpack.c.l.b16 %v461
  %v501 = vunpack.c.l.b16 %v462
  %v502 = vunpack.c.l.b16 %v463
  %v503 = vpack.c.b16 %v488, %v487
  %v504 = vpack.c.b16 %v490, %v489
  %v505 = vpack.c.b16 %v492, %v491
  %v506 = vpack.c.b16 %v494, %v493
  %v507 = vpack.c.b16 %v496, %v495
  %v508 = vpack.c.b16 %v498, %v497
  %v509 = vpack.c.b16 %v500, %v499
  %v510 = vpack.c.b16 %v502, %v501
  %519 = vmatprep.subr.bf16.mxu0 0
  %520 = vmatpush1.bf16.msra.mxu0 %v503
  %521 = vmatprep.subr.bf16.mxu0 0
  %522 = vmatpush1.bf16.msra.mxu0 %v504
  %523 = vmatprep.subr.bf16.mxu0 0
  %524 = vmatpush1.bf16.msra.mxu0 %v505
  %525 = vmatprep.subr.bf16.mxu0 0
  %526 = vmatpush1.bf16.msra.mxu0 %v506
  %527 = vmatprep.subr.bf16.mxu0 0
  %528 = vmatpush1.bf16.msra.mxu0 %v507
  %529 = vmatprep.subr.bf16.mxu0 0
  %530 = vmatpush1.bf16.msra.mxu0 %v508
  %531 = vmatprep.subr.bf16.mxu0 0
  %532 = vmatpush1.bf16.msra.mxu0 %v509
  %533 = vmatprep.subr.bf16.mxu0 0
  %534 = vmatpush1.bf16.msra.mxu0 %v510
  %535 = vmatprep.subr.bf16.mxu0 0
  %536 = vmatpush1.bf16.msra.mxu0 0
  %537 = vmatprep.subr.bf16.mxu0 0
  %538 = vmatpush1.bf16.msra.mxu0 0
  %539 = vmatprep.subr.bf16.mxu0 0
  %540 = vmatpush1.bf16.msra.mxu0 0
  %541 = vmatprep.subr.bf16.mxu0 0
  %542 = vmatpush1.bf16.msra.mxu0 0
  %543 = vmatprep.subr.bf16.mxu0 0
  %544 = vmatpush1.bf16.msra.mxu0 0
  %545 = vmatprep.subr.bf16.mxu0 0
  %546 = vmatpush1.bf16.msra.mxu0 0
  %547 = vmatprep.subr.bf16.mxu0 0
  %548 = vmatpush1.bf16.msra.mxu0 0
  %549 = vmatprep.subr.bf16.mxu0 0
  %550 = vmatpush1.bf16.msra.mxu0 0
  %551 = vmatprep.mubr.bf16.mxu0 0
  %552 = vmatmul.mubr.bf16.gmra.mrb[0].mxu0 %v447
  %v553 = vpop.f32.mrb[0].mxu0
  %v554 = vadd.f32 %v469, %v553
  %v555 = vpop.f32.mrb[0].mxu0
  %v556 = vpop.f32.mrb[0].mxu0
  %v557 = vpop.f32.mrb[0].mxu0
  %558 = vdwg.mxu0
  %559 = vst [vmem:[%s7] sm:$0xff] %v554
  // Predicated region
  $region30: #{forward.5} parent=0 // pred_check
    _
  $region31: #{forward.5} parent=0 // pred_check_branch
    %561 = sbr.rel (0) target = $region33
  $region32: #{forward.5} parent=0 // pred_region
    _
  $region33: #{forward.5} parent=0 // pred_fallthru
    _
  // Predicated region
  $region34: #{forward.5} parent=0 // pred_check
    _
  $region35: #{forward.5} parent=0 // pred_check_branch
    %563 = sbr.rel (0) target = $region37
  $region36: #{forward.5} parent=0 // pred_region
    _
  $region37: #{forward.5} parent=0 // pred_fallthru
    _

</llo_original>
